<compile_context>
chip_gen: v5e
topology: v5e:2x2
jax: 0.10.0
libtpu: 0.0.40
codegen_flags: <defaults>
</compile_context>

<pallas_src>
import math
import functools

import jax
import jax.numpy as jnp
from jax import lax
from jax.experimental import pallas as pl
from jax.experimental.pallas import tpu as pltpu

# ---------------------------------------------------------------------------
# model hyper-parameters (match AudioVideoInter(d_model=256, n_head=4))
# ---------------------------------------------------------------------------
D_MODEL = 256
NHEAD = 4
HEAD_DIM = D_MODEL // NHEAD
LN_EPS = 1e-5


# ---------------------------------------------------------------------------
# Pallas kernel: one block of `bblk` batch elements, full seq resident in VMEM
# ---------------------------------------------------------------------------
def _avi_kernel(v_ref, a_ref, wqkv_ref, woh_ref, bias_ref, out_ref):
    v = v_ref[...]                       # (Bb, T, D)  video block
    a = a_ref[...]                       # (Bb, T, D)  audio block
    bb, tq, d = v.shape
    tm = 2 * tq

    # global_feat and memory = concat([audio, video], seq-axis) built in-kernel
    g = v * a                                            # (Bb, T, D)
    mem = jnp.concatenate([a, v], axis=1)                # (Bb, 2T, D)

    # flatten rows so the projection matmuls fill the MXU M dimension
    g2 = g.reshape(bb * tq, d)                           # (Bb*T, D)
    m2 = mem.reshape(bb * tm, d)                         # (Bb*2T, D)

    b_all = bias_ref[...]                                # (8, D) packed vectors
    bq, bk, bv, bo = b_all[0:1], b_all[1:2], b_all[2:3], b_all[3:4]
    ln_g, ln_b = b_all[4:5], b_all[5:6]

    # QKV projections (full-width matmuls, N = D = 256)
    Q = jnp.dot(g2, wqkv_ref[0], preferred_element_type=jnp.float32) + bq
    K = jnp.dot(m2, wqkv_ref[1], preferred_element_type=jnp.float32) + bk
    V = jnp.dot(m2, wqkv_ref[2], preferred_element_type=jnp.float32) + bv

    Qb = Q.reshape(bb, tq, d)
    Kb = K.reshape(bb, tm, d)
    Vb = V.reshape(bb, tm, d)

    scale = 1.0 / math.sqrt(HEAD_DIM)

    # per-head attention; out-proj applied per head and accumulated (no concat)
    acc = None
    for h in range(NHEAD):                               # static unroll
        sl = slice(h * HEAD_DIM, (h + 1) * HEAD_DIM)
        qh = Qb[:, :, sl] * scale                        # (Bb, T, hd)
        kh = Kb[:, :, sl]                                # (Bb, 2T, hd)
        vh = Vb[:, :, sl]                                # (Bb, 2T, hd)

        s = jnp.einsum("bqd,bkd->bqk", qh, kh,
                       preferred_element_type=jnp.float32)   # (Bb, T, 2T)
        s = s - jnp.max(s, axis=-1, keepdims=True)
        p = jnp.exp(s)
        p = p * pl.reciprocal(jnp.sum(p, axis=-1, keepdims=True), approx=True)

        pv = jnp.einsum("bqk,bkd->bqd", p, vh,
                        preferred_element_type=jnp.float32)  # (Bb, T, hd)
        contrib = jnp.dot(pv.reshape(bb * tq, HEAD_DIM), woh_ref[h],
                          preferred_element_type=jnp.float32)  # (Bb*T, D)
        acc = contrib if acc is None else acc + contrib
    attn = acc + bo                                      # (Bb*T, D)

    # residual + LayerNorm
    x = g2 + attn
    mu = jnp.mean(x, axis=-1, keepdims=True)
    var = jnp.mean((x - mu) ** 2, axis=-1, keepdims=True)
    y = (x - mu) * lax.rsqrt(var + LN_EPS) * ln_g + ln_b

    out_ref[...] = y.reshape(bb, tq, d).astype(out_ref.dtype)
    # TODO(synk): nn.Dropout / attention-weight dropout are identity in eval
    # mode and are not lowered.


# ---------------------------------------------------------------------------
# block-size choice: ~256 rows per block, prefer >=2 grid steps (v7x dual TC),
# bblk must divide B so no masked/partial stores are ever needed.
# ---------------------------------------------------------------------------
def _choose_bblk(B, T):
    target = max(1, 256 // max(T, 1))
    divisors = [d for d in range(1, B + 1) if B % d == 0]
    cand = [d for d in divisors if d <= target and (B // d) >= 2]
    if cand:
        return max(cand)
    cand = [d for d in divisors if d <= target]
    if cand:
        return max(cand)
    return 1


# ---------------------------------------------------------------------------
# wrappers
# ---------------------------------------------------------------------------
def audio_video_inter_batch_major(video_btd, audio_btd, params):
    """video/audio: (B, T, d_model) batch-major (no wrapper transposes)."""
    B, T, D = video_btd.shape
    bblk = _choose_bblk(B, T)
    nblk = B // bblk

    # pack parameters -> 3 constant inputs (fewer DMAs / VMEM buffers)
    wqkv = jnp.stack([params["wq"], params["wk"], params["wv"]])      # (3, D, D)
    wo_heads = params["wo"].reshape(NHEAD, HEAD_DIM, D)               # (H, hd, D)
    biases = jnp.zeros((8, D), jnp.float32)
    biases = (biases.at[0].set(params["bq"]).at[1].set(params["bk"])
                    .at[2].set(params["bv"]).at[3].set(params["bo"])
                    .at[4].set(params["ln_g"]).at[5].set(params["ln_b"]))

    def data_spec():
        return pl.BlockSpec((bblk, T, D), lambda b: (b, 0, 0))

    def const_spec(shape):
        nd = len(shape)
        return pl.BlockSpec(shape, lambda b, _nd=nd: (0,) * _nd)

    return pl.pallas_call(
        _avi_kernel,
        out_shape=jax.ShapeDtypeStruct((B, T, D), jnp.float32),
        grid=(nblk,),
        in_specs=[data_spec(), data_spec(),
                  const_spec(wqkv.shape), const_spec(wo_heads.shape),
                  const_spec(biases.shape)],
        out_specs=pl.BlockSpec((bblk, T, D), lambda b: (b, 0, 0)),
        compiler_params=pltpu.CompilerParams(
            dimension_semantics=("parallel",)),
    )(video_btd, audio_btd, wqkv, wo_heads, biases)


@jax.jit
def audio_video_inter(video_feat, audio_feat, params):
    """Torch-compatible entry: seq-first (T, B, d_model) in, (T, B, d_model) out."""
    v = jnp.transpose(video_feat, (1, 0, 2)).astype(jnp.float32)
    a = jnp.transpose(audio_feat, (1, 0, 2)).astype(jnp.float32)
    out = audio_video_inter_batch_major(v, a, params)
    return jnp.transpose(out, (1, 0, 2))


# ---------------------------------------------------------------------------
# pure-JAX reference (mirrors torch forward exactly, eval mode)
# ---------------------------------------------------------------------------
def reference(video_feat, audio_feat, p):
    g = video_feat * audio_feat                                   # (T, B, D)
    mem = jnp.concatenate([audio_feat, video_feat], axis=0)       # (2T, B, D)
    Q = jnp.einsum("tbd,de->tbe", g, p["wq"]) + p["bq"]
    K = jnp.einsum("tbd,de->tbe", mem, p["wk"]) + p["bk"]
    V = jnp.einsum("tbd,de->tbe", mem, p["wv"]) + p["bv"]
    Tq, B, _ = Q.shape
    Tm = K.shape[0]
    Qh = Q.reshape(Tq, B, NHEAD, HEAD_DIM) * (1.0 / math.sqrt(HEAD_DIM))
    Kh = K.reshape(Tm, B, NHEAD, HEAD_DIM)
    Vh = V.reshape(Tm, B, NHEAD, HEAD_DIM)
    s = jnp.einsum("qbhd,kbhd->bhqk", Qh, Kh)
    w = jax.nn.softmax(s, axis=-1)
    a = jnp.einsum("bhqk,kbhd->qbhd", w, Vh).reshape(Tq, B, D_MODEL)
    a = jnp.einsum("qbd,de->qbe", a, p["wo"]) + p["bo"]
    x = g + a
    mu = jnp.mean(x, axis=-1, keepdims=True)
    var = jnp.mean((x - mu) ** 2, axis=-1, keepdims=True)
    return (x - mu) / jnp.sqrt(var + LN_EPS) * p["ln_g"] + p["ln_b"]


# ---------------------------------------------------------------------------
# deterministic parameter init (synthetic; weights stored pre-transposed: x @ W)
# ---------------------------------------------------------------------------
def init_params(key):
    ks = jax.random.split(key, 8)
    s = 0.05

    def w(k, shape):
        return jax.random.normal(k, shape, jnp.float32) * s

    return {
        "wq": w(ks[0], (D_MODEL, D_MODEL)), "bq": w(ks[1], (D_MODEL,)),
        "wk": w(ks[2], (D_MODEL, D_MODEL)), "bk": w(ks[3], (D_MODEL,)),
        "wv": w(ks[4], (D_MODEL, D_MODEL)), "bv": w(ks[5], (D_MODEL,)),
        "wo": w(ks[6], (D_MODEL, D_MODEL)), "bo": w(ks[7], (D_MODEL,)),
        # LayerNorm: PyTorch init gamma=1, beta=0
        "ln_g": jnp.ones((D_MODEL,), jnp.float32),
        "ln_b": jnp.zeros((D_MODEL,), jnp.float32),
    }


if __name__ == "__main__":
    key = jax.random.PRNGKey(0)
    kv, ka, kp = jax.random.split(key, 3)

    T, B = 8, 2
    # torch seq-first layout (T, B, d_model)
    video_feat = jax.random.normal(kv, (T, B, D_MODEL), jnp.float32)
    audio_feat = jax.random.normal(ka, (T, B, D_MODEL), jnp.float32)
    params = init_params(kp)

    out = audio_video_inter(video_feat, audio_feat, params)
    out = jax.block_until_ready(out)

    ref = reference(video_feat, audio_feat, params)
    assert out.shape == (T, B, D_MODEL)
    max_err = float(jnp.max(jnp.abs(out - ref)))
    # tolerance covers pl.reciprocal(approx=True) in the softmax denominator
    assert jnp.allclose(out, ref, atol=2e-3, rtol=2e-3), max_err

    print("KERNEL_OK")
</pallas_src>

<mosaic_0001>
module attributes {stable_mosaic.version = 11 : i64} {
  func.func @_avi_kernel(%arg0: i32, %arg1: memref<1x8x256xf32, #tpu.memory_space<vmem>>, %arg2: memref<1x8x256xf32, #tpu.memory_space<vmem>>, %arg3: memref<3x256x256xf32, #tpu.memory_space<vmem>>, %arg4: memref<4x64x256xf32, #tpu.memory_space<vmem>>, %arg5: memref<8x256xf32, #tpu.memory_space<vmem>>, %arg6: memref<1x8x256xf32, #tpu.memory_space<vmem>>) attributes {dimension_semantics = [#tpu.dimension_semantics<parallel>], iteration_bounds = array<i64: 2>, scalar_prefetch = 0 : i64, scratch_operands = 0 : i64, tpu.core_type = #tpu.core_type<tc>, window_params = [{transform_indices = @transform_0, window_bounds = array<i64: 1, 8, 256>}, {transform_indices = @transform_1, window_bounds = array<i64: 1, 8, 256>}, {pipeline_mode = #tpu.pipeline_mode<synchronous>, transform_indices = @transform_2, window_bounds = array<i64: 3, 256, 256>}, {pipeline_mode = #tpu.pipeline_mode<synchronous>, transform_indices = @transform_3, window_bounds = array<i64: 4, 64, 256>}, {pipeline_mode = #tpu.pipeline_mode<synchronous>, transform_indices = @transform_4, window_bounds = array<i64: 8, 256>}, {transform_indices = @transform_5, window_bounds = array<i64: 1, 8, 256>}]} {
    %c0 = arith.constant 0 : index
    %c0_0 = arith.constant 0 : index
    %c0_1 = arith.constant 0 : index
    %0 = vector.load %arg1[%c0, %c0_0, %c0_1] : memref<1x8x256xf32, #tpu.memory_space<vmem>>, vector<1x8x256xf32>
    %c0_2 = arith.constant 0 : index
    %c0_3 = arith.constant 0 : index
    %c0_4 = arith.constant 0 : index
    %1 = vector.load %arg2[%c0_2, %c0_3, %c0_4] : memref<1x8x256xf32, #tpu.memory_space<vmem>>, vector<1x8x256xf32>
    %2 = arith.mulf %0, %1 : vector<1x8x256xf32>
    %3 = tpu.concatenate %1, %0 in 1 : vector<1x8x256xf32>, vector<1x8x256xf32> -> vector<1x16x256xf32>
    %4 = vector.shape_cast %2 : vector<1x8x256xf32> to vector<8x256xf32>
    %5 = vector.shape_cast %3 : vector<1x16x256xf32> to vector<16x256xf32>
    %c0_5 = arith.constant 0 : index
    %c0_6 = arith.constant 0 : index
    %6 = vector.load %arg5[%c0_5, %c0_6] : memref<8x256xf32, #tpu.memory_space<vmem>>, vector<8x256xf32>
    %7 = vector.extract_strided_slice %6 {offsets = [0, 0], sizes = [1, 256], strides = [1, 1]} : vector<8x256xf32> to vector<1x256xf32>
    %8 = vector.extract_strided_slice %6 {offsets = [1, 0], sizes = [1, 256], strides = [1, 1]} : vector<8x256xf32> to vector<1x256xf32>
    %9 = vector.extract_strided_slice %6 {offsets = [2, 0], sizes = [1, 256], strides = [1, 1]} : vector<8x256xf32> to vector<1x256xf32>
    %10 = vector.extract_strided_slice %6 {offsets = [3, 0], sizes = [1, 256], strides = [1, 1]} : vector<8x256xf32> to vector<1x256xf32>
    %11 = vector.extract_strided_slice %6 {offsets = [4, 0], sizes = [1, 256], strides = [1, 1]} : vector<8x256xf32> to vector<1x256xf32>
    %12 = vector.extract_strided_slice %6 {offsets = [5, 0], sizes = [1, 256], strides = [1, 1]} : vector<8x256xf32> to vector<1x256xf32>
    %c0_7 = arith.constant 0 : index
    %c0_8 = arith.constant 0 : index
    %c0_9 = arith.constant 0 : index
    %13 = vector.load %arg3[%c0_7, %c0_8, %c0_9] : memref<3x256x256xf32, #tpu.memory_space<vmem>>, vector<1x256x256xf32>
    %14 = vector.shape_cast %13 : vector<1x256x256xf32> to vector<256x256xf32>
    %cst = arith.constant dense<0.000000e+00> : vector<8x256xf32>
    %15 = tpu.matmul %4, %14, %cst {dimension_numbers = #tpu.dot_dimension_numbers<[1], [0], [0], [1], [0, 0, 1, 1], [], []>} : vector<8x256xf32>, vector<256x256xf32>, vector<8x256xf32> -> vector<8x256xf32>
    %16 = vector.broadcast %7 : vector<1x256xf32> to vector<8x256xf32>
    %17 = arith.addf %15, %16 : vector<8x256xf32>
    %c1 = arith.constant 1 : index
    %c0_10 = arith.constant 0 : index
    %c0_11 = arith.constant 0 : index
    %18 = vector.load %arg3[%c1, %c0_10, %c0_11] : memref<3x256x256xf32, #tpu.memory_space<vmem>>, vector<1x256x256xf32>
    %19 = vector.shape_cast %18 : vector<1x256x256xf32> to vector<256x256xf32>
    %cst_12 = arith.constant dense<0.000000e+00> : vector<16x256xf32>
    %20 = tpu.matmul %5, %19, %cst_12 {dimension_numbers = #tpu.dot_dimension_numbers<[1], [0], [0], [1], [0, 0, 1, 1], [], []>} : vector<16x256xf32>, vector<256x256xf32>, vector<16x256xf32> -> vector<16x256xf32>
    %21 = vector.broadcast %8 : vector<1x256xf32> to vector<16x256xf32>
    %22 = arith.addf %20, %21 : vector<16x256xf32>
    %c2 = arith.constant 2 : index
    %c0_13 = arith.constant 0 : index
    %c0_14 = arith.constant 0 : index
    %23 = vector.load %arg3[%c2, %c0_13, %c0_14] : memref<3x256x256xf32, #tpu.memory_space<vmem>>, vector<1x256x256xf32>
    %24 = vector.shape_cast %23 : vector<1x256x256xf32> to vector<256x256xf32>
    %cst_15 = arith.constant dense<0.000000e+00> : vector<16x256xf32>
    %25 = tpu.matmul %5, %24, %cst_15 {dimension_numbers = #tpu.dot_dimension_numbers<[1], [0], [0], [1], [0, 0, 1, 1], [], []>} : vector<16x256xf32>, vector<256x256xf32>, vector<16x256xf32> -> vector<16x256xf32>
    %26 = vector.broadcast %9 : vector<1x256xf32> to vector<16x256xf32>
    %27 = arith.addf %25, %26 : vector<16x256xf32>
    %28 = vector.shape_cast %17 : vector<8x256xf32> to vector<1x8x256xf32>
    %29 = vector.shape_cast %22 : vector<16x256xf32> to vector<1x16x256xf32>
    %30 = vector.shape_cast %27 : vector<16x256xf32> to vector<1x16x256xf32>
    %31 = vector.extract_strided_slice %28 {offsets = [0, 0, 0], sizes = [1, 8, 64], strides = [1, 1, 1]} : vector<1x8x256xf32> to vector<1x8x64xf32>
    %cst_16 = arith.constant 1.250000e-01 : f32
    %32 = vector.broadcast %cst_16 : f32 to vector<1x8x64xf32>
    %33 = arith.mulf %31, %32 : vector<1x8x64xf32>
    %34 = vector.extract_strided_slice %29 {offsets = [0, 0, 0], sizes = [1, 16, 64], strides = [1, 1, 1]} : vector<1x16x256xf32> to vector<1x16x64xf32>
    %35 = vector.extract_strided_slice %30 {offsets = [0, 0, 0], sizes = [1, 16, 64], strides = [1, 1, 1]} : vector<1x16x256xf32> to vector<1x16x64xf32>
    "tpu.trace_start"() <{level = 10 : i32, message = "bqd,bkd->bqk"}> : () -> ()
    %cst_17 = arith.constant dense<0.000000e+00> : vector<1x8x16xf32>
    %36 = tpu.matmul %33, %34, %cst_17 {dimension_numbers = #tpu.dot_dimension_numbers<[2], [2], [1], [1], [0, 0, 0, 1, 1, 1], [0], [0]>} : vector<1x8x64xf32>, vector<1x16x64xf32>, vector<1x8x16xf32> -> vector<1x8x16xf32>
    "tpu.trace_stop"() : () -> ()
    %cst_18 = arith.constant dense<0xFF800000> : vector<1x8xf32>
    %37 = vector.multi_reduction <maximumf>, %36, %cst_18 [2] : vector<1x8x16xf32> to vector<1x8xf32>
    %38 = vector.shape_cast %37 : vector<1x8xf32> to vector<1x8x1xf32>
    %39 = vector.broadcast %38 : vector<1x8x1xf32> to vector<1x8x16xf32>
    %40 = arith.subf %36, %39 : vector<1x8x16xf32>
    %41 = math.exp %40 : vector<1x8x16xf32>
    %cst_19 = arith.constant dense<0.000000e+00> : vector<1x8xf32>
    %42 = vector.multi_reduction <add>, %41, %cst_19 [2] : vector<1x8x16xf32> to vector<1x8xf32>
    %43 = vector.shape_cast %42 : vector<1x8xf32> to vector<1x8x1xf32>
    %44 = tpu.reciprocal %43 {approx = true} : vector<1x8x1xf32> -> vector<1x8x1xf32>
    %45 = vector.broadcast %44 : vector<1x8x1xf32> to vector<1x8x16xf32>
    %46 = arith.mulf %41, %45 : vector<1x8x16xf32>
    "tpu.trace_start"() <{level = 10 : i32, message = "bqk,bkd->bqd"}> : () -> ()
    %cst_20 = arith.constant dense<0.000000e+00> : vector<1x8x64xf32>
    %47 = tpu.matmul %46, %35, %cst_20 {dimension_numbers = #tpu.dot_dimension_numbers<[2], [1], [1], [2], [0, 0, 0, 1, 1, 2], [0], [0]>} : vector<1x8x16xf32>, vector<1x16x64xf32>, vector<1x8x64xf32> -> vector<1x8x64xf32>
    "tpu.trace_stop"() : () -> ()
    %48 = vector.shape_cast %47 : vector<1x8x64xf32> to vector<8x64xf32>
    %c0_21 = arith.constant 0 : index
    %c0_22 = arith.constant 0 : index
    %c0_23 = arith.constant 0 : index
    %49 = vector.load %arg4[%c0_21, %c0_22, %c0_23] : memref<4x64x256xf32, #tpu.memory_space<vmem>>, vector<1x64x256xf32>
    %50 = vector.shape_cast %49 : vector<1x64x256xf32> to vector<64x256xf32>
    %cst_24 = arith.constant dense<0.000000e+00> : vector<8x256xf32>
    %51 = tpu.matmul %48, %50, %cst_24 {dimension_numbers = #tpu.dot_dimension_numbers<[1], [0], [0], [1], [0, 0, 1, 1], [], []>} : vector<8x64xf32>, vector<64x256xf32>, vector<8x256xf32> -> vector<8x256xf32>
    %52 = vector.extract_strided_slice %28 {offsets = [0, 0, 64], sizes = [1, 8, 64], strides = [1, 1, 1]} : vector<1x8x256xf32> to vector<1x8x64xf32>
    %cst_25 = arith.constant 1.250000e-01 : f32
    %53 = vector.broadcast %cst_25 : f32 to vector<1x8x64xf32>
    %54 = arith.mulf %52, %53 : vector<1x8x64xf32>
    %55 = vector.extract_strided_slice %29 {offsets = [0, 0, 64], sizes = [1, 16, 64], strides = [1, 1, 1]} : vector<1x16x256xf32> to vector<1x16x64xf32>
    %56 = vector.extract_strided_slice %30 {offsets = [0, 0, 64], sizes = [1, 16, 64], strides = [1, 1, 1]} : vector<1x16x256xf32> to vector<1x16x64xf32>
    "tpu.trace_start"() <{level = 10 : i32, message = "bqd,bkd->bqk"}> : () -> ()
    %cst_26 = arith.constant dense<0.000000e+00> : vector<1x8x16xf32>
    %57 = tpu.matmul %54, %55, %cst_26 {dimension_numbers = #tpu.dot_dimension_numbers<[2], [2], [1], [1], [0, 0, 0, 1, 1, 1], [0], [0]>} : vector<1x8x64xf32>, vector<1x16x64xf32>, vector<1x8x16xf32> -> vector<1x8x16xf32>
    "tpu.trace_stop"() : () -> ()
    %cst_27 = arith.constant dense<0xFF800000> : vector<1x8xf32>
    %58 = vector.multi_reduction <maximumf>, %57, %cst_27 [2] : vector<1x8x16xf32> to vector<1x8xf32>
    %59 = vector.shape_cast %58 : vector<1x8xf32> to vector<1x8x1xf32>
    %60 = vector.broadcast %59 : vector<1x8x1xf32> to vector<1x8x16xf32>
    %61 = arith.subf %57, %60 : vector<1x8x16xf32>
    %62 = math.exp %61 : vector<1x8x16xf32>
    %cst_28 = arith.constant dense<0.000000e+00> : vector<1x8xf32>
    %63 = vector.multi_reduction <add>, %62, %cst_28 [2] : vector<1x8x16xf32> to vector<1x8xf32>
    %64 = vector.shape_cast %63 : vector<1x8xf32> to vector<1x8x1xf32>
    %65 = tpu.reciprocal %64 {approx = true} : vector<1x8x1xf32> -> vector<1x8x1xf32>
    %66 = vector.broadcast %65 : vector<1x8x1xf32> to vector<1x8x16xf32>
    %67 = arith.mulf %62, %66 : vector<1x8x16xf32>
    "tpu.trace_start"() <{level = 10 : i32, message = "bqk,bkd->bqd"}> : () -> ()
    %cst_29 = arith.constant dense<0.000000e+00> : vector<1x8x64xf32>
    %68 = tpu.matmul %67, %56, %cst_29 {dimension_numbers = #tpu.dot_dimension_numbers<[2], [1], [1], [2], [0, 0, 0, 1, 1, 2], [0], [0]>} : vector<1x8x16xf32>, vector<1x16x64xf32>, vector<1x8x64xf32> -> vector<1x8x64xf32>
    "tpu.trace_stop"() : () -> ()
    %69 = vector.shape_cast %68 : vector<1x8x64xf32> to vector<8x64xf32>
    %c1_30 = arith.constant 1 : index
    %c0_31 = arith.constant 0 : index
    %c0_32 = arith.constant 0 : index
    %70 = vector.load %arg4[%c1_30, %c0_31, %c0_32] : memref<4x64x256xf32, #tpu.memory_space<vmem>>, vector<1x64x256xf32>
    %71 = vector.shape_cast %70 : vector<1x64x256xf32> to vector<64x256xf32>
    %cst_33 = arith.constant dense<0.000000e+00> : vector<8x256xf32>
    %72 = tpu.matmul %69, %71, %cst_33 {dimension_numbers = #tpu.dot_dimension_numbers<[1], [0], [0], [1], [0, 0, 1, 1], [], []>} : vector<8x64xf32>, vector<64x256xf32>, vector<8x256xf32> -> vector<8x256xf32>
    %73 = arith.addf %51, %72 : vector<8x256xf32>
    %74 = vector.extract_strided_slice %28 {offsets = [0, 0, 128], sizes = [1, 8, 64], strides = [1, 1, 1]} : vector<1x8x256xf32> to vector<1x8x64xf32>
    %cst_34 = arith.constant 1.250000e-01 : f32
    %75 = vector.broadcast %cst_34 : f32 to vector<1x8x64xf32>
    %76 = arith.mulf %74, %75 : vector<1x8x64xf32>
    %77 = vector.extract_strided_slice %29 {offsets = [0, 0, 128], sizes = [1, 16, 64], strides = [1, 1, 1]} : vector<1x16x256xf32> to vector<1x16x64xf32>
    %78 = vector.extract_strided_slice %30 {offsets = [0, 0, 128], sizes = [1, 16, 64], strides = [1, 1, 1]} : vector<1x16x256xf32> to vector<1x16x64xf32>
    "tpu.trace_start"() <{level = 10 : i32, message = "bqd,bkd->bqk"}> : () -> ()
    %cst_35 = arith.constant dense<0.000000e+00> : vector<1x8x16xf32>
    %79 = tpu.matmul %76, %77, %cst_35 {dimension_numbers = #tpu.dot_dimension_numbers<[2], [2], [1], [1], [0, 0, 0, 1, 1, 1], [0], [0]>} : vector<1x8x64xf32>, vector<1x16x64xf32>, vector<1x8x16xf32> -> vector<1x8x16xf32>
    "tpu.trace_stop"() : () -> ()
    %cst_36 = arith.constant dense<0xFF800000> : vector<1x8xf32>
    %80 = vector.multi_reduction <maximumf>, %79, %cst_36 [2] : vector<1x8x16xf32> to vector<1x8xf32>
    %81 = vector.shape_cast %80 : vector<1x8xf32> to vector<1x8x1xf32>
    %82 = vector.broadcast %81 : vector<1x8x1xf32> to vector<1x8x16xf32>
    %83 = arith.subf %79, %82 : vector<1x8x16xf32>
    %84 = math.exp %83 : vector<1x8x16xf32>
    %cst_37 = arith.constant dense<0.000000e+00> : vector<1x8xf32>
    %85 = vector.multi_reduction <add>, %84, %cst_37 [2] : vector<1x8x16xf32> to vector<1x8xf32>
    %86 = vector.shape_cast %85 : vector<1x8xf32> to vector<1x8x1xf32>
    %87 = tpu.reciprocal %86 {approx = true} : vector<1x8x1xf32> -> vector<1x8x1xf32>
    %88 = vector.broadcast %87 : vector<1x8x1xf32> to vector<1x8x16xf32>
    %89 = arith.mulf %84, %88 : vector<1x8x16xf32>
    "tpu.trace_start"() <{level = 10 : i32, message = "bqk,bkd->bqd"}> : () -> ()
    %cst_38 = arith.constant dense<0.000000e+00> : vector<1x8x64xf32>
    %90 = tpu.matmul %89, %78, %cst_38 {dimension_numbers = #tpu.dot_dimension_numbers<[2], [1], [1], [2], [0, 0, 0, 1, 1, 2], [0], [0]>} : vector<1x8x16xf32>, vector<1x16x64xf32>, vector<1x8x64xf32> -> vector<1x8x64xf32>
    "tpu.trace_stop"() : () -> ()
    %91 = vector.shape_cast %90 : vector<1x8x64xf32> to vector<8x64xf32>
    %c2_39 = arith.constant 2 : index
    %c0_40 = arith.constant 0 : index
    %c0_41 = arith.constant 0 : index
    %92 = vector.load %arg4[%c2_39, %c0_40, %c0_41] : memref<4x64x256xf32, #tpu.memory_space<vmem>>, vector<1x64x256xf32>
    %93 = vector.shape_cast %92 : vector<1x64x256xf32> to vector<64x256xf32>
    %cst_42 = arith.constant dense<0.000000e+00> : vector<8x256xf32>
    %94 = tpu.matmul %91, %93, %cst_42 {dimension_numbers = #tpu.dot_dimension_numbers<[1], [0], [0], [1], [0, 0, 1, 1], [], []>} : vector<8x64xf32>, vector<64x256xf32>, vector<8x256xf32> -> vector<8x256xf32>
    %95 = arith.addf %73, %94 : vector<8x256xf32>
    %96 = vector.extract_strided_slice %28 {offsets = [0, 0, 192], sizes = [1, 8, 64], strides = [1, 1, 1]} : vector<1x8x256xf32> to vector<1x8x64xf32>
    %cst_43 = arith.constant 1.250000e-01 : f32
    %97 = vector.broadcast %cst_43 : f32 to vector<1x8x64xf32>
    %98 = arith.mulf %96, %97 : vector<1x8x64xf32>
    %99 = vector.extract_strided_slice %29 {offsets = [0, 0, 192], sizes = [1, 16, 64], strides = [1, 1, 1]} : vector<1x16x256xf32> to vector<1x16x64xf32>
    %100 = vector.extract_strided_slice %30 {offsets = [0, 0, 192], sizes = [1, 16, 64], strides = [1, 1, 1]} : vector<1x16x256xf32> to vector<1x16x64xf32>
    "tpu.trace_start"() <{level = 10 : i32, message = "bqd,bkd->bqk"}> : () -> ()
    %cst_44 = arith.constant dense<0.000000e+00> : vector<1x8x16xf32>
    %101 = tpu.matmul %98, %99, %cst_44 {dimension_numbers = #tpu.dot_dimension_numbers<[2], [2], [1], [1], [0, 0, 0, 1, 1, 1], [0], [0]>} : vector<1x8x64xf32>, vector<1x16x64xf32>, vector<1x8x16xf32> -> vector<1x8x16xf32>
    "tpu.trace_stop"() : () -> ()
    %cst_45 = arith.constant dense<0xFF800000> : vector<1x8xf32>
    %102 = vector.multi_reduction <maximumf>, %101, %cst_45 [2] : vector<1x8x16xf32> to vector<1x8xf32>
    %103 = vector.shape_cast %102 : vector<1x8xf32> to vector<1x8x1xf32>
    %104 = vector.broadcast %103 : vector<1x8x1xf32> to vector<1x8x16xf32>
    %105 = arith.subf %101, %104 : vector<1x8x16xf32>
    %106 = math.exp %105 : vector<1x8x16xf32>
    %cst_46 = arith.constant dense<0.000000e+00> : vector<1x8xf32>
    %107 = vector.multi_reduction <add>, %106, %cst_46 [2] : vector<1x8x16xf32> to vector<1x8xf32>
    %108 = vector.shape_cast %107 : vector<1x8xf32> to vector<1x8x1xf32>
    %109 = tpu.reciprocal %108 {approx = true} : vector<1x8x1xf32> -> vector<1x8x1xf32>
    %110 = vector.broadcast %109 : vector<1x8x1xf32> to vector<1x8x16xf32>
    %111 = arith.mulf %106, %110 : vector<1x8x16xf32>
    "tpu.trace_start"() <{level = 10 : i32, message = "bqk,bkd->bqd"}> : () -> ()
    %cst_47 = arith.constant dense<0.000000e+00> : vector<1x8x64xf32>
    %112 = tpu.matmul %111, %100, %cst_47 {dimension_numbers = #tpu.dot_dimension_numbers<[2], [1], [1], [2], [0, 0, 0, 1, 1, 2], [0], [0]>} : vector<1x8x16xf32>, vector<1x16x64xf32>, vector<1x8x64xf32> -> vector<1x8x64xf32>
    "tpu.trace_stop"() : () -> ()
    %113 = vector.shape_cast %112 : vector<1x8x64xf32> to vector<8x64xf32>
    %c3 = arith.constant 3 : index
    %c0_48 = arith.constant 0 : index
    %c0_49 = arith.constant 0 : index
    %114 = vector.load %arg4[%c3, %c0_48, %c0_49] : memref<4x64x256xf32, #tpu.memory_space<vmem>>, vector<1x64x256xf32>
    %115 = vector.shape_cast %114 : vector<1x64x256xf32> to vector<64x256xf32>
    %cst_50 = arith.constant dense<0.000000e+00> : vector<8x256xf32>
    %116 = tpu.matmul %113, %115, %cst_50 {dimension_numbers = #tpu.dot_dimension_numbers<[1], [0], [0], [1], [0, 0, 1, 1], [], []>} : vector<8x64xf32>, vector<64x256xf32>, vector<8x256xf32> -> vector<8x256xf32>
    %117 = arith.addf %95, %116 : vector<8x256xf32>
    %118 = vector.broadcast %10 : vector<1x256xf32> to vector<8x256xf32>
    %119 = arith.addf %117, %118 : vector<8x256xf32>
    %120 = arith.addf %4, %119 : vector<8x256xf32>
    %cst_51 = arith.constant dense<0.000000e+00> : vector<8xf32>
    %121 = vector.multi_reduction <add>, %120, %cst_51 [1] : vector<8x256xf32> to vector<8xf32>
    %122 = vector.shape_cast %121 : vector<8xf32> to vector<8x1xf32>
    %cst_52 = arith.constant 2.560000e+02 : f32
    %123 = vector.broadcast %cst_52 : f32 to vector<8x1xf32>
    %124 = arith.divf %122, %123 : vector<8x1xf32>
    %125 = vector.broadcast %124 : vector<8x1xf32> to vector<8x256xf32>
    %126 = arith.subf %120, %125 : vector<8x256xf32>
    %127 = arith.mulf %126, %126 : vector<8x256xf32>
    %cst_53 = arith.constant dense<0.000000e+00> : vector<8xf32>
    %128 = vector.multi_reduction <add>, %127, %cst_53 [1] : vector<8x256xf32> to vector<8xf32>
    %129 = vector.shape_cast %128 : vector<8xf32> to vector<8x1xf32>
    %cst_54 = arith.constant 2.560000e+02 : f32
    %130 = vector.broadcast %cst_54 : f32 to vector<8x1xf32>
    %131 = arith.divf %129, %130 : vector<8x1xf32>
    %132 = vector.broadcast %124 : vector<8x1xf32> to vector<8x256xf32>
    %133 = arith.subf %120, %132 : vector<8x256xf32>
    %cst_55 = arith.constant 9.99999974E-6 : f32
    %134 = vector.broadcast %cst_55 : f32 to vector<8x1xf32>
    %135 = arith.addf %131, %134 : vector<8x1xf32>
    %136 = math.rsqrt %135 : vector<8x1xf32>
    %137 = vector.broadcast %136 : vector<8x1xf32> to vector<8x256xf32>
    %138 = arith.mulf %133, %137 : vector<8x256xf32>
    %139 = vector.broadcast %11 : vector<1x256xf32> to vector<8x256xf32>
    %140 = arith.mulf %138, %139 : vector<8x256xf32>
    %141 = vector.broadcast %12 : vector<1x256xf32> to vector<8x256xf32>
    %142 = arith.addf %140, %141 : vector<8x256xf32>
    %143 = vector.shape_cast %142 : vector<8x256xf32> to vector<1x8x256xf32>
    %c0_56 = arith.constant 0 : index
    %c0_57 = arith.constant 0 : index
    %c0_58 = arith.constant 0 : index
    %144 = vector.load %arg6[%c0_56, %c0_57, %c0_58] : memref<1x8x256xf32, #tpu.memory_space<vmem>>, vector<1x8x256xf32>
    tpu.vector_store %arg6[%c0_56, %c0_57, %c0_58], %143 {strides = array<i32>} : memref<1x8x256xf32, #tpu.memory_space<vmem>>, vector<1x8x256xf32>,
    return
  }
  func.func @transform_0(%arg0: i32) -> (i32, i32, i32) {
    %c0_i32 = arith.constant 0 : i32
    %c0_i32_0 = arith.constant 0 : i32
    %c0_i32_1 = arith.constant 0 : i32
    return %arg0, %c0_i32, %c0_i32_0 : i32, i32, i32
  }
  func.func @transform_1(%arg0: i32) -> (i32, i32, i32) {
    %c0_i32 = arith.constant 0 : i32
    %c0_i32_0 = arith.constant 0 : i32
    %c0_i32_1 = arith.constant 0 : i32
    return %arg0, %c0_i32, %c0_i32_0 : i32, i32, i32
  }
  func.func @transform_2(%arg0: i32) -> (i32, i32, i32) {
    %c0_i32 = arith.constant 0 : i32
    %c0_i32_0 = arith.constant 0 : i32
    %c0_i32_1 = arith.constant 0 : i32
    %c0_i32_2 = arith.constant 0 : i32
    return %c0_i32, %c0_i32_0, %c0_i32_1 : i32, i32, i32
  }
  func.func @transform_3(%arg0: i32) -> (i32, i32, i32) {
    %c0_i32 = arith.constant 0 : i32
    %c0_i32_0 = arith.constant 0 : i32
    %c0_i32_1 = arith.constant 0 : i32
    %c0_i32_2 = arith.constant 0 : i32
    return %c0_i32, %c0_i32_0, %c0_i32_1 : i32, i32, i32
  }
  func.func @transform_4(%arg0: i32) -> (i32, i32) {
    %c0_i32 = arith.constant 0 : i32
    %c0_i32_0 = arith.constant 0 : i32
    %c0_i32_1 = arith.constant 0 : i32
    return %c0_i32, %c0_i32_0 : i32, i32
  }
  func.func @transform_5(%arg0: i32) -> (i32, i32, i32) {
    %c0_i32 = arith.constant 0 : i32
    %c0_i32_0 = arith.constant 0 : i32
    %c0_i32_1 = arith.constant 0 : i32
    return %arg0, %c0_i32, %c0_i32_0 : i32, i32, i32
  }
}

</mosaic_0001>

<llo_original>
// kernel: audio_video_inter.1
$region0: #{audio_video_inter.1}
  #allocation0 [shape = 'u32[]', space=smem, size = 0x4, offset = 0x4, fixed_abs, tag = 'smem constant byte address 0x4 - core index']
  #allocation1 [shape = 'u32[72,128]{1,0:T(1,128)}', space=vmem, size = 0x9000, scoped, tag = 'internal scratch']
  %s0 = inlined_call_operand.vmem [shape: f32[2,8,256], index: 0, kind: input, shape index: {}]
  %s1 = inlined_call_operand.vmem [shape: f32[2,8,256], index: 1, kind: input, shape index: {}]
  %s2 = inlined_call_operand.vmem [shape: f32[3,256,256], index: 2, kind: input, shape index: {}]
  %s3 = inlined_call_operand.vmem [shape: f32[4,64,256], index: 3, kind: input, shape index: {}]
  %s4 = inlined_call_operand.vmem [shape: f32[8,256], index: 4, kind: input, shape index: {}]
  %s5 = inlined_call_operand.vmem [shape: f32[2,8,256], index: 5, kind: output, shape index: {}]
  %s6 = sld [smem:[#allocation0]]
  $region53: #{audio_video_inter.1} parent=0
    _
  %s8 = ssub.s32 1, %s6
  %s9 = scalar_select 0, %s8, %s6
  loop: start=0, step=1, limit=4
  $region2: #{audio_video_inter.1} parent=0 // loop_pre_header
    _
  $region3: #{audio_video_inter.1} parent=0 // loop_header
    %s11 = sphi 0, %s15
    %p12 = scmp.ge.s32.totalorder %s11, 4
    %s21 = sphi 0, %s23
    %s24 = sphi 0, %s21
    %s25 = sphi 0, %s24
    %s41 = sphi 0, %s25
    %s47 = sphi 0, %s49
    %s50 = sphi 0, %s47
    %s51 = sphi 0, %s50
    %s67 = sphi 0, %s51
    %s71 = sphi 0, %s71
    %s73 = sphi 0, %s71
    %s74 = sphi 0, %s73
    %s88 = sphi 0, %s74
    %s92 = sphi 0, %s92
    %s94 = sphi 0, %s92
    %s95 = sphi 0, %s94
    %s109 = sphi 0, %s95
    %s113 = sphi 0, %s113
    %s115 = sphi 0, %s113
    %s116 = sphi 0, %s115
    %s130 = sphi 0, %s116
    %s136 = sphi 0, %s138
    %s139 = sphi 0, %s136
    %s140 = sphi 0, %s139
    %s156 = sphi 0, %s140
  $region4: #{audio_video_inter.1} parent=0 // loop_header_branch
    %14 = sbr.rel (%p12) target = $region8
  $region5: #{audio_video_inter.1} parent=0 // loop_body
    %s16 = ssub.s32 %s11, 1
    %s17 = ssub.s32 %s11, 2
    %s18 = sadd.s32 %s11, 1
    %s19 = ssub.s32 %s11, %s18
    %p20 = scmp.eq.s32.totalorder %s19, 0
    %s22 = sadd.s32 %s21, 1
    %s23 = scalar_select %p20, %s21, %s22
    %p26 = pneg %p20
    %p27 = scmp.eq.s32.totalorder %s11, 1
    %p28 = por %p26, %p27
    %p29 = scmp.ne.s32.totalorder %s21, %s24
    %p30 = scmp.eq.s32.totalorder %s11, 0
    %p31 = por %p29, %p30
    %p32 = scmp.ne.s32.totalorder %s21, %s24
    %p33 = scmp.eq.s32.totalorder %s16, 1
    %p34 = por %p32, %p33
    %p35 = scmp.ne.s32.totalorder %s24, %s25
    %p36 = scmp.eq.s32.totalorder %s16, 0
    %p37 = por %p35, %p36
    %p38 = scmp.ne.s32.totalorder %s24, %s25
    %p39 = scmp.eq.s32.totalorder %s17, 1
    %p40 = por %p38, %p39
    %p42 = scmp.ne.s32.totalorder %s25, %s41
    %p43 = scmp.eq.s32.totalorder %s17, 0
    %p44 = por %p42, %p43
    %s45 = ssub.s32 %s11, %s18
    %p46 = scmp.eq.s32.totalorder %s45, 0
    %s48 = sadd.s32 %s47, 1
    %s49 = scalar_select %p46, %s47, %s48
    %p52 = pneg %p46
    %p53 = scmp.eq.s32.totalorder %s11, 1
    %p54 = por %p52, %p53
    %p55 = scmp.ne.s32.totalorder %s47, %s50
    %p56 = scmp.eq.s32.totalorder %s11, 0
    %p57 = por %p55, %p56
    %p58 = scmp.ne.s32.totalorder %s47, %s50
    %p59 = scmp.eq.s32.totalorder %s16, 1
    %p60 = por %p58, %p59
    %p61 = scmp.ne.s32.totalorder %s50, %s51
    %p62 = scmp.eq.s32.totalorder %s16, 0
    %p63 = por %p61, %p62
    %p64 = scmp.ne.s32.totalorder %s50, %s51
    %p65 = scmp.eq.s32.totalorder %s17, 1
    %p66 = por %p64, %p65
    %p68 = scmp.ne.s32.totalorder %s51, %s67
    %p69 = scmp.eq.s32.totalorder %s17, 0
    %p70 = por %p68, %p69
    %s72 = sadd.s32 %s71, 1
    %p75 = scmp.eq.s32.totalorder %s11, 1
    %p76 = scmp.ne.s32.totalorder %s71, %s73
    %p77 = scmp.eq.s32.totalorder %s11, 0
    %p78 = por %p76, %p77
    %p79 = scmp.ne.s32.totalorder %s71, %s73
    %p80 = scmp.eq.s32.totalorder %s16, 1
    %p81 = por %p79, %p80
    %p82 = scmp.ne.s32.totalorder %s73, %s74
    %p83 = scmp.eq.s32.totalorder %s16, 0
    %p84 = por %p82, %p83
    %p85 = scmp.ne.s32.totalorder %s73, %s74
    %p86 = scmp.eq.s32.totalorder %s17, 1
    %p87 = por %p85, %p86
    %p89 = scmp.ne.s32.totalorder %s74, %s88
    %p90 = scmp.eq.s32.totalorder %s17, 0
    %p91 = por %p89, %p90
    %s93 = sadd.s32 %s92, 1
    %p96 = scmp.eq.s32.totalorder %s11, 1
    %p97 = scmp.ne.s32.totalorder %s92, %s94
    %p98 = scmp.eq.s32.totalorder %s11, 0
    %p99 = por %p97, %p98
    %p100 = scmp.ne.s32.totalorder %s92, %s94
    %p101 = scmp.eq.s32.totalorder %s16, 1
    %p102 = por %p100, %p101
    %p103 = scmp.ne.s32.totalorder %s94, %s95
    %p104 = scmp.eq.s32.totalorder %s16, 0
    %p105 = por %p103, %p104
    %p106 = scmp.ne.s32.totalorder %s94, %s95
    %p107 = scmp.eq.s32.totalorder %s17, 1
    %p108 = por %p106, %p107
    %p110 = scmp.ne.s32.totalorder %s95, %s109
    %p111 = scmp.eq.s32.totalorder %s17, 0
    %p112 = por %p110, %p111
    %s114 = sadd.s32 %s113, 1
    %p117 = scmp.eq.s32.totalorder %s11, 1
    %p118 = scmp.ne.s32.totalorder %s113, %s115
    %p119 = scmp.eq.s32.totalorder %s11, 0
    %p120 = por %p118, %p119
    %p121 = scmp.ne.s32.totalorder %s113, %s115
    %p122 = scmp.eq.s32.totalorder %s16, 1
    %p123 = por %p121, %p122
    %p124 = scmp.ne.s32.totalorder %s115, %s116
    %p125 = scmp.eq.s32.totalorder %s16, 0
    %p126 = por %p124, %p125
    %p127 = scmp.ne.s32.totalorder %s115, %s116
    %p128 = scmp.eq.s32.totalorder %s17, 1
    %p129 = por %p127, %p128
    %p131 = scmp.ne.s32.totalorder %s116, %s130
    %p132 = scmp.eq.s32.totalorder %s17, 0
    %p133 = por %p131, %p132
    %s134 = ssub.s32 %s11, %s18
    %p135 = scmp.eq.s32.totalorder %s134, 0
    %s137 = sadd.s32 %s136, 1
    %s138 = scalar_select %p135, %s136, %s137
    %p141 = pneg %p135
    %p142 = scmp.eq.s32.totalorder %s11, 1
    %p143 = por %p141, %p142
    %p144 = scmp.ne.s32.totalorder %s136, %s139
    %p145 = scmp.eq.s32.totalorder %s11, 0
    %p146 = por %p144, %p145
    %p147 = scmp.ne.s32.totalorder %s136, %s139
    %p148 = scmp.eq.s32.totalorder %s16, 1
    %p149 = por %p147, %p148
    %p150 = scmp.ne.s32.totalorder %s139, %s140
    %p151 = scmp.eq.s32.totalorder %s16, 0
    %p152 = por %p150, %p151
    %p153 = scmp.ne.s32.totalorder %s139, %s140
    %p154 = scmp.eq.s32.totalorder %s17, 1
    %p155 = por %p153, %p154
    %p157 = scmp.ne.s32.totalorder %s140, %s156
    %p158 = scmp.eq.s32.totalorder %s17, 0
    %p159 = por %p157, %p158
    %p160 = scmp.le.s32.totalorder 1, %s11
    %p161 = scmp.lt.s32.totalorder %s11, 3
    %p162 = pnand %p160, %p161
    %p163 = pneg %p162
    // Predicated region
    $region9: #{audio_video_inter.1} parent=5 // pred_check
      _
    $region10: #{audio_video_inter.1} parent=5 // pred_check_branch
      %165 = sbr.rel (%p162) target = $region12
    $region11: #{audio_video_inter.1} parent=5 // pred_region
      %s166 = ssub.s32 %s11, 1
      // Predicated region
      $region13: #{audio_video_inter.1} parent=11 // pred_check
        %p167 = pneg %p84
      $region14: #{audio_video_inter.1} parent=11 // pred_check_branch
        %169 = sbr.rel (%p167) target = $region16
      $region15: #{audio_video_inter.1} parent=11 // pred_region
        _
      $region16: #{audio_video_inter.1} parent=11 // pred_fallthru
        _
      // Predicated region
      $region17: #{audio_video_inter.1} parent=11 // pred_check
        %p170 = pneg %p105
      $region18: #{audio_video_inter.1} parent=11 // pred_check_branch
        %172 = sbr.rel (%p170) target = $region20
      $region19: #{audio_video_inter.1} parent=11 // pred_region
        _
      $region20: #{audio_video_inter.1} parent=11 // pred_fallthru
        _
      // Predicated region
      $region21: #{audio_video_inter.1} parent=11 // pred_check
        %p173 = pneg %p126
      $region22: #{audio_video_inter.1} parent=11 // pred_check_branch
        %175 = sbr.rel (%p173) target = $region24
      $region23: #{audio_video_inter.1} parent=11 // pred_region
        _
      $region24: #{audio_video_inter.1} parent=11 // pred_fallthru
        _
    $region12: #{audio_video_inter.1} parent=5 // pred_fallthru
      _
    %p176 = scmp.lt.s32.totalorder %s11, 2
    // Predicated region
    $region25: #{audio_video_inter.1} parent=5 // pred_check
      %p177 = pneg %p176
    $region26: #{audio_video_inter.1} parent=5 // pred_check_branch
      %179 = sbr.rel (%p177) target = $region28
    $region27: #{audio_video_inter.1} parent=5 // pred_region
      // Predicated region
      $region29: #{audio_video_inter.1} parent=27 // pred_check
        %p180 = pneg %p31
      $region30: #{audio_video_inter.1} parent=27 // pred_check_branch
        %182 = sbr.rel (%p180) target = $region32
      $region31: #{audio_video_inter.1} parent=27 // pred_region
        %p183 = scmp.lt.s32.totalorder %s11, 1
        %s184 = scalar_select %p183, %s11, 1
        %s185 = smul.addr %s184, 2
        %s186 = smul.addr %s185, 8
        %s187 = scalar_lea.vmem %s0, %s186
      $region32: #{audio_video_inter.1} parent=27 // pred_fallthru
        _
      // Predicated region
      $region33: #{audio_video_inter.1} parent=27 // pred_check
        %p188 = pneg %p57
      $region34: #{audio_video_inter.1} parent=27 // pred_check_branch
        %190 = sbr.rel (%p188) target = $region36
      $region35: #{audio_video_inter.1} parent=27 // pred_region
        %p191 = scmp.lt.s32.totalorder %s11, 1
        %s192 = scalar_select %p191, %s11, 1
        %s193 = smul.addr %s192, 2
        %s194 = smul.addr %s193, 8
        %s195 = scalar_lea.vmem %s1, %s194
      $region36: #{audio_video_inter.1} parent=27 // pred_fallthru
        _
    $region28: #{audio_video_inter.1} parent=5 // pred_fallthru
      _
    %p196 = scmp.le.s32.totalorder 1, %s11
    %p197 = scmp.lt.s32.totalorder %s11, 3
    %p198 = pnand %p196, %p197
    %p199 = pneg %p198
    // Predicated region
    $region37: #{audio_video_inter.1} parent=5 // pred_check
      _
    $region38: #{audio_video_inter.1} parent=5 // pred_check_branch
      %201 = sbr.rel (%p198) target = $region40
    $region39: #{audio_video_inter.1} parent=5 // pred_region
      %s202 = ssub.s32 %s11, 1
      %p203 = scmp.lt.s32.totalorder %s16, 1
      %s204 = scalar_select %p203, %s16, 1
      %s205 = smul.addr %s204, 2
      %s206 = smul.addr %s205, 8
      %s207 = scalar_lea.vmem %s0, %s206
      %p208 = pneg %p37
      %p209 = pneg %p34
      %p210 = scmp.lt.s32.totalorder %s16, 1
      %s211 = scalar_select %p210, %s16, 1
      %s212 = smul.addr %s211, 2
      %s213 = smul.addr %s212, 8
      %s214 = scalar_lea.vmem %s1, %s213
      %p215 = pneg %p63
      %p216 = pneg %p60
      %p217 = pneg %p84
      %p218 = pneg %p81
      %p219 = pneg %p105
      %p220 = pneg %p102
      %p221 = pneg %p126
      %p222 = pneg %p123
      %p223 = pneg %p152
      %p224 = pneg %p149
      %p225 = scmp.lt.s32.totalorder %s16, 1
      %s226 = scalar_select %p225, %s16, 1
      %s227 = smul.addr %s226, 2
      %s228 = smul.addr %s227, 8
      %s229 = scalar_lea.vmem %s5, %s228
      %p230 = scmp.lt.s32.totalorder %s16, 1
      %s231 = scalar_select %p230, %s16, 1
      %s232 = smul.addr %s231, 2
      %s233 = smul.addr %s232, 8
      %s234 = scalar_lea.vmem %s0, %s233
      %p235 = scmp.lt.s32.totalorder %s16, 1
      %s236 = scalar_select %p235, %s16, 1
      %s237 = smul.addr %s236, 2
      %s238 = smul.addr %s237, 8
      %s239 = scalar_lea.vmem %s1, %s238
      %p240 = scmp.lt.s32.totalorder %s16, 1
      %s241 = scalar_select %p240, %s16, 1
      %s242 = smul.addr %s241, 2
      %s243 = smul.addr %s242, 8
      %s244 = scalar_lea.vmem %s5, %s243
      %v245 = vld [vmem:[%s234] sm:$0xff]
      %v246 = vld [vmem:[%s234 + $0x8] sm:$0xff]
      %v247 = vld [vmem:[%s239] sm:$0xff]
      %v248 = vld [vmem:[%s239 + $0x8] sm:$0xff]
      %v249 = vmul.f32 %v245, %v247
      %v250 = vmul.f32 %v246, %v248
      %v251 = vld [vmem:[%s4] sm:$0xff]
      %v252 = vld [vmem:[%s4 + $0x8] sm:$0xff]
      %v253 = vld [vmem:[%s2] sm:$0xff]
      %v254 = vld [vmem:[%s2 + $0x8] sm:$0xff]
      %v255 = vld [vmem:[%s2 + $0x10] sm:$0xff]
      %v256 = vld [vmem:[%s2 + $0x18] sm:$0xff]
      %v257 = vld [vmem:[%s2 + $0x20] sm:$0xff]
      %v258 = vld [vmem:[%s2 + $0x28] sm:$0xff]
      %v259 = vld [vmem:[%s2 + $0x30] sm:$0xff]
      %v260 = vld [vmem:[%s2 + $0x38] sm:$0xff]
      %v261 = vld [vmem:[%s2 + $0x40] sm:$0xff]
      %v262 = vld [vmem:[%s2 + $0x48] sm:$0xff]
      %v263 = vld [vmem:[%s2 + $0x50] sm:$0xff]
      %v264 = vld [vmem:[%s2 + $0x58] sm:$0xff]
      %v265 = vld [vmem:[%s2 + $0x60] sm:$0xff]
      %v266 = vld [vmem:[%s2 + $0x68] sm:$0xff]
      %v267 = vld [vmem:[%s2 + $0x70] sm:$0xff]
      %v268 = vld [vmem:[%s2 + $0x78] sm:$0xff]
      %v269 = vld [vmem:[%s2 + $0x80] sm:$0xff]
      %v270 = vld [vmem:[%s2 + $0x88] sm:$0xff]
      %v271 = vld [vmem:[%s2 + $0x90] sm:$0xff]
      %v272 = vld [vmem:[%s2 + $0x98] sm:$0xff]
      %v273 = vld [vmem:[%s2 + $0xa0] sm:$0xff]
      %v274 = vld [vmem:[%s2 + $0xa8] sm:$0xff]
      %v275 = vld [vmem:[%s2 + $0xb0] sm:$0xff]
      %v276 = vld [vmem:[%s2 + $0xb8] sm:$0xff]
      %v277 = vld [vmem:[%s2 + $0xc0] sm:$0xff]
      %v278 = vld [vmem:[%s2 + $0xc8] sm:$0xff]
      %v279 = vld [vmem:[%s2 + $0xd0] sm:$0xff]
      %v280 = vld [vmem:[%s2 + $0xd8] sm:$0xff]
      %v281 = vld [vmem:[%s2 + $0xe0] sm:$0xff]
      %v282 = vld [vmem:[%s2 + $0xe8] sm:$0xff]
      %v283 = vld [vmem:[%s2 + $0xf0] sm:$0xff]
      %v284 = vld [vmem:[%s2 + $0xf8] sm:$0xff]
      %v285 = vld [vmem:[%s2 + $0x100] sm:$0xff]
      %v286 = vld [vmem:[%s2 + $0x108] sm:$0xff]
      %v287 = vld [vmem:[%s2 + $0x110] sm:$0xff]
      %v288 = vld [vmem:[%s2 + $0x118] sm:$0xff]
      %v289 = vld [vmem:[%s2 + $0x120] sm:$0xff]
      %v290 = vld [vmem:[%s2 + $0x128] sm:$0xff]
      %v291 = vld [vmem:[%s2 + $0x130] sm:$0xff]
      %v292 = vld [vmem:[%s2 + $0x138] sm:$0xff]
      %v293 = vld [vmem:[%s2 + $0x140] sm:$0xff]
      %v294 = vld [vmem:[%s2 + $0x148] sm:$0xff]
      %v295 = vld [vmem:[%s2 + $0x150] sm:$0xff]
      %v296 = vld [vmem:[%s2 + $0x158] sm:$0xff]
      %v297 = vld [vmem:[%s2 + $0x160] sm:$0xff]
      %v298 = vld [vmem:[%s2 + $0x168] sm:$0xff]
      %v299 = vld [vmem:[%s2 + $0x170] sm:$0xff]
      %v300 = vld [vmem:[%s2 + $0x178] sm:$0xff]
      %v301 = vld [vmem:[%s2 + $0x180] sm:$0xff]
      %v302 = vld [vmem:[%s2 + $0x188] sm:$0xff]
      %v303 = vld [vmem:[%s2 + $0x190] sm:$0xff]
      %v304 = vld [vmem:[%s2 + $0x198] sm:$0xff]
      %v305 = vld [vmem:[%s2 + $0x1a0] sm:$0xff]
      %v306 = vld [vmem:[%s2 + $0x1a8] sm:$0xff]
      %v307 = vld [vmem:[%s2 + $0x1b0] sm:$0xff]
      %v308 = vld [vmem:[%s2 + $0x1b8] sm:$0xff]
      %v309 = vld [vmem:[%s2 + $0x1c0] sm:$0xff]
      %v310 = vld [vmem:[%s2 + $0x1c8] sm:$0xff]
      %v311 = vld [vmem:[%s2 + $0x1d0] sm:$0xff]
      %v312 = vld [vmem:[%s2 + $0x1d8] sm:$0xff]
      %v313 = vld [vmem:[%s2 + $0x1e0] sm:$0xff]
      %v314 = vld [vmem:[%s2 + $0x1e8] sm:$0xff]
      %v315 = vld [vmem:[%s2 + $0x1f0] sm:$0xff]
      %v316 = vld [vmem:[%s2 + $0x1f8] sm:$0xff]
      %v317 = vperm.slane %v251, 0
      %v318 = vperm.slane %v252, 0
      %319 = vmatpush.msra.mxu0 %v283
      %320 = vmatpush.msra.mxu0 %v281
      %321 = vmatpush.msra.mxu0 %v279
      %322 = vmatpush.msra.mxu0 %v277
      %323 = vmatpush.msra.mxu0 %v275
      %324 = vmatpush.msra.mxu0 %v273
      %325 = vmatpush.msra.mxu0 %v271
      %326 = vmatpush.msra.mxu0 %v269
      %327 = vmatpush.msra.mxu0 %v267
      %328 = vmatpush.msra.mxu0 %v265
      %329 = vmatpush.msra.mxu0 %v263
      %330 = vmatpush.msra.mxu0 %v261
      %331 = vmatpush.msra.mxu0 %v259
      %332 = vmatpush.msra.mxu0 %v257
      %333 = vmatpush.msra.mxu0 %v255
      %334 = vmatpush.msra.mxu0 %v253
      %335 = vmatmul.f32.gmra.mxu0 %v249
      %v336 = vpop.f32.mrf.mxu0
      %v337 = vadd.f32 %v317, %v336
      %338 = vdwg.mxu0
      %339 = vmatpush.msra.mxu0 %v315
      %340 = vmatpush.msra.mxu0 %v313
      %341 = vmatpush.msra.mxu0 %v311
      %342 = vmatpush.msra.mxu0 %v309
      %343 = vmatpush.msra.mxu0 %v307
      %344 = vmatpush.msra.mxu0 %v305
      %345 = vmatpush.msra.mxu0 %v303
      %346 = vmatpush.msra.mxu0 %v301
      %347 = vmatpush.msra.mxu0 %v299
      %348 = vmatpush.msra.mxu0 %v297
      %349 = vmatpush.msra.mxu0 %v295
      %350 = vmatpush.msra.mxu0 %v293
      %351 = vmatpush.msra.mxu0 %v291
      %352 = vmatpush.msra.mxu0 %v289
      %353 = vmatpush.msra.mxu0 %v287
      %354 = vmatpush.msra.mxu0 %v285
      %355 = vmatmul.f32.gmra.mxu0 %v250
      %v356 = vpop.f32.mrf.mxu0
      %v357 = vadd.f32 %v337, %v356
      %358 = vdwg.mxu0
      %359 = vmatpush.msra.mxu0 %v284
      %360 = vmatpush.msra.mxu0 %v282
      %361 = vmatpush.msra.mxu0 %v280
      %362 = vmatpush.msra.mxu0 %v278
      %363 = vmatpush.msra.mxu0 %v276
      %364 = vmatpush.msra.mxu0 %v274
      %365 = vmatpush.msra.mxu0 %v272
      %366 = vmatpush.msra.mxu0 %v270
      %367 = vmatpush.msra.mxu0 %v268
      %368 = vmatpush.msra.mxu0 %v266
      %369 = vmatpush.msra.mxu0 %v264
      %370 = vmatpush.msra.mxu0 %v262
      %371 = vmatpush.msra.mxu0 %v260
      %372 = vmatpush.msra.mxu0 %v258
      %373 = vmatpush.msra.mxu0 %v256
      %374 = vmatpush.msra.mxu0 %v254
      %375 = vmatmul.f32.gmra.mxu0 %v249
      %v376 = vpop.f32.mrf.mxu0
      %v377 = vadd.f32 %v318, %v376
      %378 = vdwg.mxu0
      %379 = vmatpush.msra.mxu0 %v316
      %380 = vmatpush.msra.mxu0 %v314
      %381 = vmatpush.msra.mxu0 %v312
      %382 = vmatpush.msra.mxu0 %v310
      %383 = vmatpush.msra.mxu0 %v308
      %384 = vmatpush.msra.mxu0 %v306
      %385 = vmatpush.msra.mxu0 %v304
      %386 = vmatpush.msra.mxu0 %v302
      %387 = vmatpush.msra.mxu0 %v300
      %388 = vmatpush.msra.mxu0 %v298
      %389 = vmatpush.msra.mxu0 %v296
      %390 = vmatpush.msra.mxu0 %v294
      %391 = vmatpush.msra.mxu0 %v292
      %392 = vmatpush.msra.mxu0 %v290
      %393 = vmatpush.msra.mxu0 %v288
      %394 = vmatpush.msra.mxu0 %v286
      %395 = vmatmul.f32.gmra.mxu0 %v250
      %v396 = vpop.f32.mrf.mxu0
      %v397 = vadd.f32 %v377, %v396
      %398 = vdwg.mxu0
      %s399 = scalar_lea.vmem %s2, 512
      %v400 = vld [vmem:[%s399] sm:$0xff]
      %v401 = vld [vmem:[%s399 + $0x8] sm:$0xff]
      %v402 = vld [vmem:[%s399 + $0x10] sm:$0xff]
      %v403 = vld [vmem:[%s399 + $0x18] sm:$0xff]
      %v404 = vld [vmem:[%s399 + $0x20] sm:$0xff]
      %v405 = vld [vmem:[%s399 + $0x28] sm:$0xff]
      %v406 = vld [vmem:[%s399 + $0x30] sm:$0xff]
      %v407 = vld [vmem:[%s399 + $0x38] sm:$0xff]
      %v408 = vld [vmem:[%s399 + $0x40] sm:$0xff]
      %v409 = vld [vmem:[%s399 + $0x48] sm:$0xff]
      %v410 = vld [vmem:[%s399 + $0x50] sm:$0xff]
      %v411 = vld [vmem:[%s399 + $0x58] sm:$0xff]
      %v412 = vld [vmem:[%s399 + $0x60] sm:$0xff]
      %v413 = vld [vmem:[%s399 + $0x68] sm:$0xff]
      %v414 = vld [vmem:[%s399 + $0x70] sm:$0xff]
      %v415 = vld [vmem:[%s399 + $0x78] sm:$0xff]
      %v416 = vld [vmem:[%s399 + $0x80] sm:$0xff]
      %v417 = vld [vmem:[%s399 + $0x88] sm:$0xff]
      %v418 = vld [vmem:[%s399 + $0x90] sm:$0xff]
      %v419 = vld [vmem:[%s399 + $0x98] sm:$0xff]
      %v420 = vld [vmem:[%s399 + $0xa0] sm:$0xff]
      %v421 = vld [vmem:[%s399 + $0xa8] sm:$0xff]
      %v422 = vld [vmem:[%s399 + $0xb0] sm:$0xff]
      %v423 = vld [vmem:[%s399 + $0xb8] sm:$0xff]
      %v424 = vld [vmem:[%s399 + $0xc0] sm:$0xff]
      %v425 = vld [vmem:[%s399 + $0xc8] sm:$0xff]
      %v426 = vld [vmem:[%s399 + $0xd0] sm:$0xff]
      %v427 = vld [vmem:[%s399 + $0xd8] sm:$0xff]
      %v428 = vld [vmem:[%s399 + $0xe0] sm:$0xff]
      %v429 = vld [vmem:[%s399 + $0xe8] sm:$0xff]
      %v430 = vld [vmem:[%s399 + $0xf0] sm:$0xff]
      %v431 = vld [vmem:[%s399 + $0xf8] sm:$0xff]
      %v432 = vld [vmem:[%s399 + $0x100] sm:$0xff]
      %v433 = vld [vmem:[%s399 + $0x108] sm:$0xff]
      %v434 = vld [vmem:[%s399 + $0x110] sm:$0xff]
      %v435 = vld [vmem:[%s399 + $0x118] sm:$0xff]
      %v436 = vld [vmem:[%s399 + $0x120] sm:$0xff]
      %v437 = vld [vmem:[%s399 + $0x128] sm:$0xff]
      %v438 = vld [vmem:[%s399 + $0x130] sm:$0xff]
      %v439 = vld [vmem:[%s399 + $0x138] sm:$0xff]
      %v440 = vld [vmem:[%s399 + $0x140] sm:$0xff]
      %v441 = vld [vmem:[%s399 + $0x148] sm:$0xff]
      %v442 = vld [vmem:[%s399 + $0x150] sm:$0xff]
      %v443 = vld [vmem:[%s399 + $0x158] sm:$0xff]
      %v444 = vld [vmem:[%s399 + $0x160] sm:$0xff]
      %v445 = vld [vmem:[%s399 + $0x168] sm:$0xff]
      %v446 = vld [vmem:[%s399 + $0x170] sm:$0xff]
      %v447 = vld [vmem:[%s399 + $0x178] sm:$0xff]
      %v448 = vld [vmem:[%s399 + $0x180] sm:$0xff]
      %v449 = vld [vmem:[%s399 + $0x188] sm:$0xff]
      %v450 = vld [vmem:[%s399 + $0x190] sm:$0xff]
      %v451 = vld [vmem:[%s399 + $0x198] sm:$0xff]
      %v452 = vld [vmem:[%s399 + $0x1a0] sm:$0xff]
      %v453 = vld [vmem:[%s399 + $0x1a8] sm:$0xff]
      %v454 = vld [vmem:[%s399 + $0x1b0] sm:$0xff]
      %v455 = vld [vmem:[%s399 + $0x1b8] sm:$0xff]
      %v456 = vld [vmem:[%s399 + $0x1c0] sm:$0xff]
      %v457 = vld [vmem:[%s399 + $0x1c8] sm:$0xff]
      %v458 = vld [vmem:[%s399 + $0x1d0] sm:$0xff]
      %v459 = vld [vmem:[%s399 + $0x1d8] sm:$0xff]
      %v460 = vld [vmem:[%s399 + $0x1e0] sm:$0xff]
      %v461 = vld [vmem:[%s399 + $0x1e8] sm:$0xff]
      %v462 = vld [vmem:[%s399 + $0x1f0] sm:$0xff]
      %v463 = vld [vmem:[%s399 + $0x1f8] sm:$0xff]
      %v464 = vperm.slane %v251, 1
      %v465 = vperm.slane %v252, 1
      %466 = vmatpush.msra.mxu0 %v430
      %467 = vmatpush.msra.mxu0 %v428
      %468 = vmatpush.msra.mxu0 %v426
      %469 = vmatpush.msra.mxu0 %v424
      %470 = vmatpush.msra.mxu0 %v422
      %471 = vmatpush.msra.mxu0 %v420
      %472 = vmatpush.msra.mxu0 %v418
      %473 = vmatpush.msra.mxu0 %v416
      %474 = vmatpush.msra.mxu0 %v414
      %475 = vmatpush.msra.mxu0 %v412
      %476 = vmatpush.msra.mxu0 %v410
      %477 = vmatpush.msra.mxu0 %v408
      %478 = vmatpush.msra.mxu0 %v406
      %479 = vmatpush.msra.mxu0 %v404
      %480 = vmatpush.msra.mxu0 %v402
      %481 = vmatpush.msra.mxu0 %v400
      %482 = vmatmul.f32.gmra.mxu0 %v247
      %v483 = vpop.f32.mrf.mxu0
      %v484 = vadd.f32 %v464, %v483
      %485 = vmatmul.f32.gmra.mxu0 %v245
      %v486 = vpop.f32.mrf.mxu0
      %v487 = vadd.f32 %v464, %v486
      %488 = vdwg.mxu0
      %489 = vmatpush.msra.mxu0 %v462
      %490 = vmatpush.msra.mxu0 %v460
      %491 = vmatpush.msra.mxu0 %v458
      %492 = vmatpush.msra.mxu0 %v456
      %493 = vmatpush.msra.mxu0 %v454
      %494 = vmatpush.msra.mxu0 %v452
      %495 = vmatpush.msra.mxu0 %v450
      %496 = vmatpush.msra.mxu0 %v448
      %497 = vmatpush.msra.mxu0 %v446
      %498 = vmatpush.msra.mxu0 %v444
      %499 = vmatpush.msra.mxu0 %v442
      %500 = vmatpush.msra.mxu0 %v440
      %501 = vmatpush.msra.mxu0 %v438
      %502 = vmatpush.msra.mxu0 %v436
      %503 = vmatpush.msra.mxu0 %v434
      %504 = vmatpush.msra.mxu0 %v432
      %505 = vmatmul.f32.gmra.mxu0 %v248
      %v506 = vpop.f32.mrf.mxu0
      %v507 = vadd.f32 %v484, %v506
      %508 = vmatmul.f32.gmra.mxu0 %v246
      %v509 = vpop.f32.mrf.mxu0
      %v510 = vadd.f32 %v487, %v509
      %511 = vdwg.mxu0
      %512 = vmatpush.msra.mxu0 %v431
      %513 = vmatpush.msra.mxu0 %v429
      %514 = vmatpush.msra.mxu0 %v427
      %515 = vmatpush.msra.mxu0 %v425
      %516 = vmatpush.msra.mxu0 %v423
      %517 = vmatpush.msra.mxu0 %v421
      %518 = vmatpush.msra.mxu0 %v419
      %519 = vmatpush.msra.mxu0 %v417
      %520 = vmatpush.msra.mxu0 %v415
      %521 = vmatpush.msra.mxu0 %v413
      %522 = vmatpush.msra.mxu0 %v411
      %523 = vmatpush.msra.mxu0 %v409
      %524 = vmatpush.msra.mxu0 %v407
      %525 = vmatpush.msra.mxu0 %v405
      %526 = vmatpush.msra.mxu0 %v403
      %527 = vmatpush.msra.mxu0 %v401
      %528 = vmatmul.f32.gmra.mxu0 %v247
      %v529 = vpop.f32.mrf.mxu0
      %v530 = vadd.f32 %v465, %v529
      %531 = vmatmul.f32.gmra.mxu0 %v245
      %v532 = vpop.f32.mrf.mxu0
      %v533 = vadd.f32 %v465, %v532
      %534 = vdwg.mxu0
      %535 = vmatpush.msra.mxu0 %v463
      %536 = vmatpush.msra.mxu0 %v461
      %537 = vmatpush.msra.mxu0 %v459
      %538 = vmatpush.msra.mxu0 %v457
      %539 = vmatpush.msra.mxu0 %v455
      %540 = vmatpush.msra.mxu0 %v453
      %541 = vmatpush.msra.mxu0 %v451
      %542 = vmatpush.msra.mxu0 %v449
      %543 = vmatpush.msra.mxu0 %v447
      %544 = vmatpush.msra.mxu0 %v445
      %545 = vmatpush.msra.mxu0 %v443
      %546 = vmatpush.msra.mxu0 %v441
      %547 = vmatpush.msra.mxu0 %v439
      %548 = vmatpush.msra.mxu0 %v437
      %549 = vmatpush.msra.mxu0 %v435
      %550 = vmatpush.msra.mxu0 %v433
      %551 = vmatmul.f32.gmra.mxu0 %v248
      %v552 = vpop.f32.mrf.mxu0
      %v553 = vadd.f32 %v530, %v552
      %554 = vmatmul.f32.gmra.mxu0 %v246
      %v555 = vpop.f32.mrf.mxu0
      %v556 = vadd.f32 %v533, %v555
      %557 = vdwg.mxu0
      %s558 = scalar_lea.vmem %s2, 1024
      %v559 = vld [vmem:[%s558] sm:$0xff]
      %v560 = vld [vmem:[%s558 + $0x8] sm:$0xff]
      %v561 = vld [vmem:[%s558 + $0x10] sm:$0xff]
      %v562 = vld [vmem:[%s558 + $0x18] sm:$0xff]
      %v563 = vld [vmem:[%s558 + $0x20] sm:$0xff]
      %v564 = vld [vmem:[%s558 + $0x28] sm:$0xff]
      %v565 = vld [vmem:[%s558 + $0x30] sm:$0xff]
      %v566 = vld [vmem:[%s558 + $0x38] sm:$0xff]
      %v567 = vld [vmem:[%s558 + $0x40] sm:$0xff]
      %v568 = vld [vmem:[%s558 + $0x48] sm:$0xff]
      %v569 = vld [vmem:[%s558 + $0x50] sm:$0xff]
      %v570 = vld [vmem:[%s558 + $0x58] sm:$0xff]
      %v571 = vld [vmem:[%s558 + $0x60] sm:$0xff]
      %v572 = vld [vmem:[%s558 + $0x68] sm:$0xff]
      %v573 = vld [vmem:[%s558 + $0x70] sm:$0xff]
      %v574 = vld [vmem:[%s558 + $0x78] sm:$0xff]
      %v575 = vld [vmem:[%s558 + $0x80] sm:$0xff]
      %v576 = vld [vmem:[%s558 + $0x88] sm:$0xff]
      %v577 = vld [vmem:[%s558 + $0x90] sm:$0xff]
      %v578 = vld [vmem:[%s558 + $0x98] sm:$0xff]
      %v579 = vld [vmem:[%s558 + $0xa0] sm:$0xff]
      %v580 = vld [vmem:[%s558 + $0xa8] sm:$0xff]
      %v581 = vld [vmem:[%s558 + $0xb0] sm:$0xff]
      %v582 = vld [vmem:[%s558 + $0xb8] sm:$0xff]
      %v583 = vld [vmem:[%s558 + $0xc0] sm:$0xff]
      %v584 = vld [vmem:[%s558 + $0xc8] sm:$0xff]
      %v585 = vld [vmem:[%s558 + $0xd0] sm:$0xff]
      %v586 = vld [vmem:[%s558 + $0xd8] sm:$0xff]
      %v587 = vld [vmem:[%s558 + $0xe0] sm:$0xff]
      %v588 = vld [vmem:[%s558 + $0xe8] sm:$0xff]
      %v589 = vld [vmem:[%s558 + $0xf0] sm:$0xff]
      %v590 = vld [vmem:[%s558 + $0xf8] sm:$0xff]
      %v591 = vld [vmem:[%s558 + $0x100] sm:$0xff]
      %v592 = vld [vmem:[%s558 + $0x108] sm:$0xff]
      %v593 = vld [vmem:[%s558 + $0x110] sm:$0xff]
      %v594 = vld [vmem:[%s558 + $0x118] sm:$0xff]
      %v595 = vld [vmem:[%s558 + $0x120] sm:$0xff]
      %v596 = vld [vmem:[%s558 + $0x128] sm:$0xff]
      %v597 = vld [vmem:[%s558 + $0x130] sm:$0xff]
      %v598 = vld [vmem:[%s558 + $0x138] sm:$0xff]
      %v599 = vld [vmem:[%s558 + $0x140] sm:$0xff]
      %v600 = vld [vmem:[%s558 + $0x148] sm:$0xff]
      %v601 = vld [vmem:[%s558 + $0x150] sm:$0xff]
      %v602 = vld [vmem:[%s558 + $0x158] sm:$0xff]
      %v603 = vld [vmem:[%s558 + $0x160] sm:$0xff]
      %v604 = vld [vmem:[%s558 + $0x168] sm:$0xff]
      %v605 = vld [vmem:[%s558 + $0x170] sm:$0xff]
      %v606 = vld [vmem:[%s558 + $0x178] sm:$0xff]
      %v607 = vld [vmem:[%s558 + $0x180] sm:$0xff]
      %v608 = vld [vmem:[%s558 + $0x188] sm:$0xff]
      %v609 = vld [vmem:[%s558 + $0x190] sm:$0xff]
      %v610 = vld [vmem:[%s558 + $0x198] sm:$0xff]
      %v611 = vld [vmem:[%s558 + $0x1a0] sm:$0xff]
      %v612 = vld [vmem:[%s558 + $0x1a8] sm:$0xff]
      %v613 = vld [vmem:[%s558 + $0x1b0] sm:$0xff]
      %v614 = vld [vmem:[%s558 + $0x1b8] sm:$0xff]
      %v615 = vld [vmem:[%s558 + $0x1c0] sm:$0xff]
      %v616 = vld [vmem:[%s558 + $0x1c8] sm:$0xff]
      %v617 = vld [vmem:[%s558 + $0x1d0] sm:$0xff]
      %v618 = vld [vmem:[%s558 + $0x1d8] sm:$0xff]
      %v619 = vld [vmem:[%s558 + $0x1e0] sm:$0xff]
      %v620 = vld [vmem:[%s558 + $0x1e8] sm:$0xff]
      %v621 = vld [vmem:[%s558 + $0x1f0] sm:$0xff]
      %v622 = vld [vmem:[%s558 + $0x1f8] sm:$0xff]
      %v623 = vperm.slane %v251, 2
      %v624 = vperm.slane %v252, 2
      %625 = vmatpush.msra.mxu0 %v589
      %626 = vmatpush.msra.mxu0 %v587
      %627 = vmatpush.msra.mxu0 %v585
      %628 = vmatpush.msra.mxu0 %v583
      %629 = vmatpush.msra.mxu0 %v581
      %630 = vmatpush.msra.mxu0 %v579
      %631 = vmatpush.msra.mxu0 %v577
      %632 = vmatpush.msra.mxu0 %v575
      %633 = vmatpush.msra.mxu0 %v573
      %634 = vmatpush.msra.mxu0 %v571
      %635 = vmatpush.msra.mxu0 %v569
      %636 = vmatpush.msra.mxu0 %v567
      %637 = vmatpush.msra.mxu0 %v565
      %638 = vmatpush.msra.mxu0 %v563
      %639 = vmatpush.msra.mxu0 %v561
      %640 = vmatpush.msra.mxu0 %v559
      %641 = vmatmul.f32.gmra.mxu0 %v247
      %v642 = vpop.f32.mrf.mxu0
      %v643 = vadd.f32 %v623, %v642
      %644 = vmatmul.f32.gmra.mxu0 %v245
      %v645 = vpop.f32.mrf.mxu0
      %v646 = vadd.f32 %v623, %v645
      %647 = vdwg.mxu0
      %648 = vmatpush.msra.mxu0 %v621
      %649 = vmatpush.msra.mxu0 %v619
      %650 = vmatpush.msra.mxu0 %v617
      %651 = vmatpush.msra.mxu0 %v615
      %652 = vmatpush.msra.mxu0 %v613
      %653 = vmatpush.msra.mxu0 %v611
      %654 = vmatpush.msra.mxu0 %v609
      %655 = vmatpush.msra.mxu0 %v607
      %656 = vmatpush.msra.mxu0 %v605
      %657 = vmatpush.msra.mxu0 %v603
      %658 = vmatpush.msra.mxu0 %v601
      %659 = vmatpush.msra.mxu0 %v599
      %660 = vmatpush.msra.mxu0 %v597
      %661 = vmatpush.msra.mxu0 %v595
      %662 = vmatpush.msra.mxu0 %v593
      %663 = vmatpush.msra.mxu0 %v591
      %664 = vmatmul.f32.gmra.mxu0 %v248
      %v665 = vpop.f32.mrf.mxu0
      %v666 = vadd.f32 %v643, %v665
      %667 = vmatmul.f32.gmra.mxu0 %v246
      %v668 = vpop.f32.mrf.mxu0
      %v669 = vadd.f32 %v646, %v668
      %670 = vdwg.mxu0
      %671 = vmatpush.msra.mxu0 %v590
      %672 = vmatpush.msra.mxu0 %v588
      %673 = vmatpush.msra.mxu0 %v586
      %674 = vmatpush.msra.mxu0 %v584
      %675 = vmatpush.msra.mxu0 %v582
      %676 = vmatpush.msra.mxu0 %v580
      %677 = vmatpush.msra.mxu0 %v578
      %678 = vmatpush.msra.mxu0 %v576
      %679 = vmatpush.msra.mxu0 %v574
      %680 = vmatpush.msra.mxu0 %v572
      %681 = vmatpush.msra.mxu0 %v570
      %682 = vmatpush.msra.mxu0 %v568
      %683 = vmatpush.msra.mxu0 %v566
      %684 = vmatpush.msra.mxu0 %v564
      %685 = vmatpush.msra.mxu0 %v562
      %686 = vmatpush.msra.mxu0 %v560
      %687 = vmatmul.f32.gmra.mxu0 %v247
      %v688 = vpop.f32.mrf.mxu0
      %v689 = vadd.f32 %v624, %v688
      %690 = vmatmul.f32.gmra.mxu0 %v245
      %v691 = vpop.f32.mrf.mxu0
      %v692 = vadd.f32 %v624, %v691
      %693 = vdwg.mxu0
      %694 = vmatpush.msra.mxu0 %v622
      %695 = vmatpush.msra.mxu0 %v620
      %696 = vmatpush.msra.mxu0 %v618
      %697 = vmatpush.msra.mxu0 %v616
      %698 = vmatpush.msra.mxu0 %v614
      %699 = vmatpush.msra.mxu0 %v612
      %700 = vmatpush.msra.mxu0 %v610
      %701 = vmatpush.msra.mxu0 %v608
      %702 = vmatpush.msra.mxu0 %v606
      %703 = vmatpush.msra.mxu0 %v604
      %704 = vmatpush.msra.mxu0 %v602
      %705 = vmatpush.msra.mxu0 %v600
      %706 = vmatpush.msra.mxu0 %v598
      %707 = vmatpush.msra.mxu0 %v596
      %708 = vmatpush.msra.mxu0 %v594
      %709 = vmatpush.msra.mxu0 %v592
      %710 = vmatmul.f32.gmra.mxu0 %v248
      %v711 = vpop.f32.mrf.mxu0
      %v712 = vadd.f32 %v689, %v711
      %713 = vmatmul.f32.gmra.mxu0 %v246
      %v714 = vpop.f32.mrf.mxu0
      %v715 = vadd.f32 %v692, %v714
      %716 = vdwg.mxu0
      %v717 = vmul.f32 %v357, 0.125
      %vm718 = vcmask 523264
      %v720 = vsel %vm718, %v717, 0
      %v723 = vsel %vm718, %v507, 0
      %v726 = vsel %vm718, %v510, 0
      %728 = vmatpush.xpose.msra.mxu0 0.0
      %729 = vmatpush.xpose.msra.mxu0 0.0
      %730 = vmatpush.xpose.msra.mxu0 0.0
      %731 = vmatpush.xpose.msra.mxu0 0.0
      %732 = vmatpush.xpose.msra.mxu0 0.0
      %733 = vmatpush.xpose.msra.mxu0 0.0
      %734 = vmatpush.xpose.msra.mxu0 0.0
      %735 = vmatpush.xpose.msra.mxu0 0.0
      %736 = vmatpush.xpose.msra.mxu0 0.0
      %737 = vmatpush.xpose.msra.mxu0 0.0
      %738 = vmatpush.xpose.msra.mxu0 0.0
      %739 = vmatpush.xpose.msra.mxu0 0.0
      %740 = vmatpush.xpose.msra.mxu0 0.0
      %741 = vmatpush.xpose.msra.mxu0 0.0
      %742 = vmatpush.xpose.msra.mxu0 %v726
      %743 = vmatpush.xpose.msra.mxu0 %v723
      %744 = vmatmul.f32.gmra.mxu0 %v720
      %v745 = vpop.f32.mrf.mxu0
      %v746 = vadd.f32 0.0, %v745
      %747 = vdwg.mxu0
      %vm748 = vcmask 130048
      %v749 = vsel %vm748, %v746, -inf
      %750 = vmax.xlane.f32.xlu0 %v749
      %v751 = vpop.xlane.xlu0 %750
      %v752 = vsub.f32 %v746, %v751
      %v753 = vmul.f32 %v752, 1.442695
      %v754 = vpow.pop %v753
      %v755 = vsel %vm748, %v754, 0.0
      %756 = vadd.xlane.f32.xlu0 %v755
      %v757 = vpop.xlane.xlu0 %756
      %v758 = vrcp.pop %v757
      %v759 = vmul.f32 %v754, %v758
      %v761 = vsel %vm748, %v759, 0
      %763 = vmatpush.msra.mxu0 0.0
      %764 = vmatpush.msra.mxu0 0.0
      %765 = vmatpush.msra.mxu0 0.0
      %766 = vmatpush.msra.mxu0 0.0
      %767 = vmatpush.msra.mxu0 0.0
      %768 = vmatpush.msra.mxu0 0.0
      %769 = vmatpush.msra.mxu0 0.0
      %770 = vmatpush.msra.mxu0 0.0
      %771 = vmatpush.msra.mxu0 0.0
      %772 = vmatpush.msra.mxu0 0.0
      %773 = vmatpush.msra.mxu0 0.0
      %774 = vmatpush.msra.mxu0 0.0
      %775 = vmatpush.msra.mxu0 0.0
      %776 = vmatpush.msra.mxu0 0.0
      %777 = vmatpush.msra.mxu0 %v669
      %778 = vmatpush.msra.mxu0 %v666
      %779 = vmatmul.f32.gmra.mxu0 %v761
      %v780 = vpop.f32.mrf.mxu0
      %v781 = vadd.f32 0.0, %v780
      %782 = vdwg.mxu0
      %v783 = vld [vmem:[%s3] sm:$0xff]
      %v784 = vld [vmem:[%s3 + $0x8] sm:$0xff]
      %v785 = vld [vmem:[%s3 + $0x10] sm:$0xff]
      %v786 = vld [vmem:[%s3 + $0x18] sm:$0xff]
      %v787 = vld [vmem:[%s3 + $0x20] sm:$0xff]
      %v788 = vld [vmem:[%s3 + $0x28] sm:$0xff]
      %v789 = vld [vmem:[%s3 + $0x30] sm:$0xff]
      %v790 = vld [vmem:[%s3 + $0x38] sm:$0xff]
      %v791 = vld [vmem:[%s3 + $0x40] sm:$0xff]
      %v792 = vld [vmem:[%s3 + $0x48] sm:$0xff]
      %v793 = vld [vmem:[%s3 + $0x50] sm:$0xff]
      %v794 = vld [vmem:[%s3 + $0x58] sm:$0xff]
      %v795 = vld [vmem:[%s3 + $0x60] sm:$0xff]
      %v796 = vld [vmem:[%s3 + $0x68] sm:$0xff]
      %v797 = vld [vmem:[%s3 + $0x70] sm:$0xff]
      %v798 = vld [vmem:[%s3 + $0x78] sm:$0xff]
      %799 = vrot.lane.b32.xlu0 %v717, 64
      %v800 = vpop.permute.xlu0 %799
      %801 = vrot.lane.b32.xlu0 %v507, 64
      %v802 = vpop.permute.xlu0 %801
      %803 = vrot.lane.b32.xlu0 %v510, 64
      %v804 = vpop.permute.xlu0 %803
      %v805 = vsel %vm718, %v800, 0
      %v807 = vsel %vm718, %v802, 0
      %v809 = vsel %vm718, %v804, 0
      %811 = vmatpush.xpose.msra.mxu0 0.0
      %812 = vmatpush.xpose.msra.mxu0 0.0
      %813 = vmatpush.xpose.msra.mxu0 0.0
      %814 = vmatpush.xpose.msra.mxu0 0.0
      %815 = vmatpush.xpose.msra.mxu0 0.0
      %816 = vmatpush.xpose.msra.mxu0 0.0
      %817 = vmatpush.xpose.msra.mxu0 0.0
      %818 = vmatpush.xpose.msra.mxu0 0.0
      %819 = vmatpush.xpose.msra.mxu0 0.0
      %820 = vmatpush.xpose.msra.mxu0 0.0
      %821 = vmatpush.xpose.msra.mxu0 0.0
      %822 = vmatpush.xpose.msra.mxu0 0.0
      %823 = vmatpush.xpose.msra.mxu0 0.0
      %824 = vmatpush.xpose.msra.mxu0 0.0
      %825 = vmatpush.xpose.msra.mxu0 %v809
      %826 = vmatpush.xpose.msra.mxu0 %v807
      %827 = vmatmul.f32.gmra.mxu0 %v805
      %v828 = vpop.f32.mrf.mxu0
      %v829 = vadd.f32 0.0, %v828
      %830 = vdwg.mxu0
      %v831 = vsel %vm748, %v829, -inf
      %832 = vmax.xlane.f32.xlu0 %v831
      %v833 = vpop.xlane.xlu0 %832
      %v834 = vsub.f32 %v829, %v833
      %v835 = vmul.f32 %v834, 1.442695
      %v836 = vpow.pop %v835
      %v837 = vsel %vm748, %v836, 0.0
      %838 = vadd.xlane.f32.xlu0 %v837
      %v839 = vpop.xlane.xlu0 %838
      %v840 = vrcp.pop %v839
      %v841 = vmul.f32 %v836, %v840
      %844 = vrot.lane.b32.xlu0 %v666, 64
      %v845 = vpop.permute.xlu0 %844
      %846 = vrot.lane.b32.xlu0 %v669, 64
      %v847 = vpop.permute.xlu0 %846
      %v851 = vsel %vm748, %v841, 0
      %853 = vmatpush.msra.mxu0 0.0
      %854 = vmatpush.msra.mxu0 0.0
      %855 = vmatpush.msra.mxu0 0.0
      %856 = vmatpush.msra.mxu0 0.0
      %857 = vmatpush.msra.mxu0 0.0
      %858 = vmatpush.msra.mxu0 0.0
      %859 = vmatpush.msra.mxu0 0.0
      %860 = vmatpush.msra.mxu0 0.0
      %861 = vmatpush.msra.mxu0 0.0
      %862 = vmatpush.msra.mxu0 0.0
      %863 = vmatpush.msra.mxu0 0.0
      %864 = vmatpush.msra.mxu0 0.0
      %865 = vmatpush.msra.mxu0 0.0
      %866 = vmatpush.msra.mxu0 0.0
      %867 = vmatpush.msra.mxu0 %v847
      %868 = vmatpush.msra.mxu0 %v845
      %869 = vmatmul.f32.gmra.mxu0 %v851
      %v870 = vpop.f32.mrf.mxu0
      %v871 = vadd.f32 0.0, %v870
      %872 = vdwg.mxu0
      %s873 = scalar_lea.vmem %s3, 128
      %v874 = vld [vmem:[%s873] sm:$0xff]
      %v875 = vld [vmem:[%s873 + $0x8] sm:$0xff]
      %v876 = vld [vmem:[%s873 + $0x10] sm:$0xff]
      %v877 = vld [vmem:[%s873 + $0x18] sm:$0xff]
      %v878 = vld [vmem:[%s873 + $0x20] sm:$0xff]
      %v879 = vld [vmem:[%s873 + $0x28] sm:$0xff]
      %v880 = vld [vmem:[%s873 + $0x30] sm:$0xff]
      %v881 = vld [vmem:[%s873 + $0x38] sm:$0xff]
      %v882 = vld [vmem:[%s873 + $0x40] sm:$0xff]
      %v883 = vld [vmem:[%s873 + $0x48] sm:$0xff]
      %v884 = vld [vmem:[%s873 + $0x50] sm:$0xff]
      %v885 = vld [vmem:[%s873 + $0x58] sm:$0xff]
      %v886 = vld [vmem:[%s873 + $0x60] sm:$0xff]
      %v887 = vld [vmem:[%s873 + $0x68] sm:$0xff]
      %v888 = vld [vmem:[%s873 + $0x70] sm:$0xff]
      %v889 = vld [vmem:[%s873 + $0x78] sm:$0xff]
      %v891 = vsel %vm718, %v871, 0
      %893 = vmatpush.msra.mxu0 0.0
      %894 = vmatpush.msra.mxu0 0.0
      %895 = vmatpush.msra.mxu0 0.0
      %896 = vmatpush.msra.mxu0 0.0
      %897 = vmatpush.msra.mxu0 0.0
      %898 = vmatpush.msra.mxu0 0.0
      %899 = vmatpush.msra.mxu0 0.0
      %900 = vmatpush.msra.mxu0 0.0
      %901 = vmatpush.msra.mxu0 %v888
      %902 = vmatpush.msra.mxu0 %v886
      %903 = vmatpush.msra.mxu0 %v884
      %904 = vmatpush.msra.mxu0 %v882
      %905 = vmatpush.msra.mxu0 %v880
      %906 = vmatpush.msra.mxu0 %v878
      %907 = vmatpush.msra.mxu0 %v876
      %908 = vmatpush.msra.mxu0 %v874
      %909 = vmatmul.f32.gmra.mxu0 %v891
      %v910 = vpop.f32.mrf.mxu0
      %v911 = vadd.f32 0.0, %v910
      %912 = vdwg.mxu0
      %913 = vmatpush.msra.mxu0 0.0
      %914 = vmatpush.msra.mxu0 0.0
      %915 = vmatpush.msra.mxu0 0.0
      %916 = vmatpush.msra.mxu0 0.0
      %917 = vmatpush.msra.mxu0 0.0
      %918 = vmatpush.msra.mxu0 0.0
      %919 = vmatpush.msra.mxu0 0.0
      %920 = vmatpush.msra.mxu0 0.0
      %921 = vmatpush.msra.mxu0 %v889
      %922 = vmatpush.msra.mxu0 %v887
      %923 = vmatpush.msra.mxu0 %v885
      %924 = vmatpush.msra.mxu0 %v883
      %925 = vmatpush.msra.mxu0 %v881
      %926 = vmatpush.msra.mxu0 %v879
      %927 = vmatpush.msra.mxu0 %v877
      %928 = vmatpush.msra.mxu0 %v875
      %929 = vmatmul.f32.gmra.mxu0 %v891
      %v930 = vpop.f32.mrf.mxu0
      %v931 = vadd.f32 0.0, %v930
      %932 = vdwg.mxu0
      %v934 = vsel %vm718, %v781, 0
      %936 = vmatpush.msra.mxu0 0.0
      %937 = vmatpush.msra.mxu0 0.0
      %938 = vmatpush.msra.mxu0 0.0
      %939 = vmatpush.msra.mxu0 0.0
      %940 = vmatpush.msra.mxu0 0.0
      %941 = vmatpush.msra.mxu0 0.0
      %942 = vmatpush.msra.mxu0 0.0
      %943 = vmatpush.msra.mxu0 0.0
      %944 = vmatpush.msra.mxu0 %v797
      %945 = vmatpush.msra.mxu0 %v795
      %946 = vmatpush.msra.mxu0 %v793
      %947 = vmatpush.msra.mxu0 %v791
      %948 = vmatpush.msra.mxu0 %v789
      %949 = vmatpush.msra.mxu0 %v787
      %950 = vmatpush.msra.mxu0 %v785
      %951 = vmatpush.msra.mxu0 %v783
      %952 = vmatmul.f32.gmra.mxu0 %v934
      %v953 = vpop.f32.mrf.mxu0
      %v954 = vadd.f32 %v911, %v953
      %955 = vdwg.mxu0
      %956 = vmatpush.msra.mxu0 0.0
      %957 = vmatpush.msra.mxu0 0.0
      %958 = vmatpush.msra.mxu0 0.0
      %959 = vmatpush.msra.mxu0 0.0
      %960 = vmatpush.msra.mxu0 0.0
      %961 = vmatpush.msra.mxu0 0.0
      %962 = vmatpush.msra.mxu0 0.0
      %963 = vmatpush.msra.mxu0 0.0
      %964 = vmatpush.msra.mxu0 %v798
      %965 = vmatpush.msra.mxu0 %v796
      %966 = vmatpush.msra.mxu0 %v794
      %967 = vmatpush.msra.mxu0 %v792
      %968 = vmatpush.msra.mxu0 %v790
      %969 = vmatpush.msra.mxu0 %v788
      %970 = vmatpush.msra.mxu0 %v786
      %971 = vmatpush.msra.mxu0 %v784
      %972 = vmatmul.f32.gmra.mxu0 %v934
      %v973 = vpop.f32.mrf.mxu0
      %v974 = vadd.f32 %v931, %v973
      %975 = vdwg.mxu0
      %v976 = vmul.f32 %v397, 0.125
      %v978 = vsel %vm718, %v976, 0
      %v981 = vsel %vm718, %v553, 0
      %v984 = vsel %vm718, %v556, 0
      %986 = vmatpush.xpose.msra.mxu0 0.0
      %987 = vmatpush.xpose.msra.mxu0 0.0
      %988 = vmatpush.xpose.msra.mxu0 0.0
      %989 = vmatpush.xpose.msra.mxu0 0.0
      %990 = vmatpush.xpose.msra.mxu0 0.0
      %991 = vmatpush.xpose.msra.mxu0 0.0
      %992 = vmatpush.xpose.msra.mxu0 0.0
      %993 = vmatpush.xpose.msra.mxu0 0.0
      %994 = vmatpush.xpose.msra.mxu0 0.0
      %995 = vmatpush.xpose.msra.mxu0 0.0
      %996 = vmatpush.xpose.msra.mxu0 0.0
      %997 = vmatpush.xpose.msra.mxu0 0.0
      %998 = vmatpush.xpose.msra.mxu0 0.0
      %999 = vmatpush.xpose.msra.mxu0 0.0
      %1000 = vmatpush.xpose.msra.mxu0 %v984
      %1001 = vmatpush.xpose.msra.mxu0 %v981
      %1002 = vmatmul.f32.gmra.mxu0 %v978
      %v1003 = vpop.f32.mrf.mxu0
      %v1004 = vadd.f32 0.0, %v1003
      %1005 = vdwg.mxu0
      %v1006 = vsel %vm748, %v1004, -inf
      %1007 = vmax.xlane.f32.xlu0 %v1006
      %v1008 = vpop.xlane.xlu0 %1007
      %v1009 = vsub.f32 %v1004, %v1008
      %v1010 = vmul.f32 %v1009, 1.442695
      %v1011 = vpow.pop %v1010
      %v1012 = vsel %vm748, %v1011, 0.0
      %1013 = vadd.xlane.f32.xlu0 %v1012
      %v1014 = vpop.xlane.xlu0 %1013
      %v1015 = vrcp.pop %v1014
      %v1016 = vmul.f32 %v1011, %v1015
      %v1018 = vsel %vm748, %v1016, 0
      %1020 = vmatpush.msra.mxu0 0.0
      %1021 = vmatpush.msra.mxu0 0.0
      %1022 = vmatpush.msra.mxu0 0.0
      %1023 = vmatpush.msra.mxu0 0.0
      %1024 = vmatpush.msra.mxu0 0.0
      %1025 = vmatpush.msra.mxu0 0.0
      %1026 = vmatpush.msra.mxu0 0.0
      %1027 = vmatpush.msra.mxu0 0.0
      %1028 = vmatpush.msra.mxu0 0.0
      %1029 = vmatpush.msra.mxu0 0.0
      %1030 = vmatpush.msra.mxu0 0.0
      %1031 = vmatpush.msra.mxu0 0.0
      %1032 = vmatpush.msra.mxu0 0.0
      %1033 = vmatpush.msra.mxu0 0.0
      %1034 = vmatpush.msra.mxu0 %v715
      %1035 = vmatpush.msra.mxu0 %v712
      %1036 = vmatmul.f32.gmra.mxu0 %v1018
      %v1037 = vpop.f32.mrf.mxu0
      %v1038 = vadd.f32 0.0, %v1037
      %1039 = vdwg.mxu0
      %s1040 = scalar_lea.vmem %s3, 256
      %v1041 = vld [vmem:[%s1040] sm:$0xff]
      %v1042 = vld [vmem:[%s1040 + $0x8] sm:$0xff]
      %v1043 = vld [vmem:[%s1040 + $0x10] sm:$0xff]
      %v1044 = vld [vmem:[%s1040 + $0x18] sm:$0xff]
      %v1045 = vld [vmem:[%s1040 + $0x20] sm:$0xff]
      %v1046 = vld [vmem:[%s1040 + $0x28] sm:$0xff]
      %v1047 = vld [vmem:[%s1040 + $0x30] sm:$0xff]
      %v1048 = vld [vmem:[%s1040 + $0x38] sm:$0xff]
      %v1049 = vld [vmem:[%s1040 + $0x40] sm:$0xff]
      %v1050 = vld [vmem:[%s1040 + $0x48] sm:$0xff]
      %v1051 = vld [vmem:[%s1040 + $0x50] sm:$0xff]
      %v1052 = vld [vmem:[%s1040 + $0x58] sm:$0xff]
      %v1053 = vld [vmem:[%s1040 + $0x60] sm:$0xff]
      %v1054 = vld [vmem:[%s1040 + $0x68] sm:$0xff]
      %v1055 = vld [vmem:[%s1040 + $0x70] sm:$0xff]
      %v1056 = vld [vmem:[%s1040 + $0x78] sm:$0xff]
      %v1058 = vsel %vm718, %v1038, 0
      %1060 = vmatpush.msra.mxu0 0.0
      %1061 = vmatpush.msra.mxu0 0.0
      %1062 = vmatpush.msra.mxu0 0.0
      %1063 = vmatpush.msra.mxu0 0.0
      %1064 = vmatpush.msra.mxu0 0.0
      %1065 = vmatpush.msra.mxu0 0.0
      %1066 = vmatpush.msra.mxu0 0.0
      %1067 = vmatpush.msra.mxu0 0.0
      %1068 = vmatpush.msra.mxu0 %v1055
      %1069 = vmatpush.msra.mxu0 %v1053
      %1070 = vmatpush.msra.mxu0 %v1051
      %1071 = vmatpush.msra.mxu0 %v1049
      %1072 = vmatpush.msra.mxu0 %v1047
      %1073 = vmatpush.msra.mxu0 %v1045
      %1074 = vmatpush.msra.mxu0 %v1043
      %1075 = vmatpush.msra.mxu0 %v1041
      %1076 = vmatmul.f32.gmra.mxu0 %v1058
      %v1077 = vpop.f32.mrf.mxu0
      %v1078 = vadd.f32 0.0, %v1077
      %1079 = vdwg.mxu0
      %1080 = vmatpush.msra.mxu0 0.0
      %1081 = vmatpush.msra.mxu0 0.0
      %1082 = vmatpush.msra.mxu0 0.0
      %1083 = vmatpush.msra.mxu0 0.0
      %1084 = vmatpush.msra.mxu0 0.0
      %1085 = vmatpush.msra.mxu0 0.0
      %1086 = vmatpush.msra.mxu0 0.0
      %1087 = vmatpush.msra.mxu0 0.0
      %1088 = vmatpush.msra.mxu0 %v1056
      %1089 = vmatpush.msra.mxu0 %v1054
      %1090 = vmatpush.msra.mxu0 %v1052
      %1091 = vmatpush.msra.mxu0 %v1050
      %1092 = vmatpush.msra.mxu0 %v1048
      %1093 = vmatpush.msra.mxu0 %v1046
      %1094 = vmatpush.msra.mxu0 %v1044
      %1095 = vmatpush.msra.mxu0 %v1042
      %1096 = vmatmul.f32.gmra.mxu0 %v1058
      %v1097 = vpop.f32.mrf.mxu0
      %v1098 = vadd.f32 0.0, %v1097
      %1099 = vdwg.mxu0
      %v1100 = vadd.f32 %v954, %v1078
      %v1101 = vadd.f32 %v974, %v1098
      %1102 = vrot.lane.b32.xlu0 %v976, 64
      %v1103 = vpop.permute.xlu0 %1102
      %1104 = vrot.lane.b32.xlu0 %v553, 64
      %v1105 = vpop.permute.xlu0 %1104
      %1106 = vrot.lane.b32.xlu0 %v556, 64
      %v1107 = vpop.permute.xlu0 %1106
      %v1108 = vsel %vm718, %v1103, 0
      %v1110 = vsel %vm718, %v1105, 0
      %v1112 = vsel %vm718, %v1107, 0
      %1114 = vmatpush.xpose.msra.mxu0 0.0
      %1115 = vmatpush.xpose.msra.mxu0 0.0
      %1116 = vmatpush.xpose.msra.mxu0 0.0
      %1117 = vmatpush.xpose.msra.mxu0 0.0
      %1118 = vmatpush.xpose.msra.mxu0 0.0
      %1119 = vmatpush.xpose.msra.mxu0 0.0
      %1120 = vmatpush.xpose.msra.mxu0 0.0
      %1121 = vmatpush.xpose.msra.mxu0 0.0
      %1122 = vmatpush.xpose.msra.mxu0 0.0
      %1123 = vmatpush.xpose.msra.mxu0 0.0
      %1124 = vmatpush.xpose.msra.mxu0 0.0
      %1125 = vmatpush.xpose.msra.mxu0 0.0
      %1126 = vmatpush.xpose.msra.mxu0 0.0
      %1127 = vmatpush.xpose.msra.mxu0 0.0
      %1128 = vmatpush.xpose.msra.mxu0 %v1112
      %1129 = vmatpush.xpose.msra.mxu0 %v1110
      %1130 = vmatmul.f32.gmra.mxu0 %v1108
      %v1131 = vpop.f32.mrf.mxu0
      %v1132 = vadd.f32 0.0, %v1131
      %1133 = vdwg.mxu0
      %v1134 = vsel %vm748, %v1132, -inf
      %1135 = vmax.xlane.f32.xlu0 %v1134
      %v1136 = vpop.xlane.xlu0 %1135
      %v1137 = vsub.f32 %v1132, %v1136
      %v1138 = vmul.f32 %v1137, 1.442695
      %v1139 = vpow.pop %v1138
      %v1140 = vsel %vm748, %v1139, 0.0
      %1141 = vadd.xlane.f32.xlu0 %v1140
      %v1142 = vpop.xlane.xlu0 %1141
      %v1143 = vrcp.pop %v1142
      %v1144 = vmul.f32 %v1139, %v1143
      %1147 = vrot.lane.b32.xlu0 %v712, 64
      %v1148 = vpop.permute.xlu0 %1147
      %1149 = vrot.lane.b32.xlu0 %v715, 64
      %v1150 = vpop.permute.xlu0 %1149
      %v1154 = vsel %vm748, %v1144, 0
      %1156 = vmatpush.msra.mxu0 0.0
      %1157 = vmatpush.msra.mxu0 0.0
      %1158 = vmatpush.msra.mxu0 0.0
      %1159 = vmatpush.msra.mxu0 0.0
      %1160 = vmatpush.msra.mxu0 0.0
      %1161 = vmatpush.msra.mxu0 0.0
      %1162 = vmatpush.msra.mxu0 0.0
      %1163 = vmatpush.msra.mxu0 0.0
      %1164 = vmatpush.msra.mxu0 0.0
      %1165 = vmatpush.msra.mxu0 0.0
      %1166 = vmatpush.msra.mxu0 0.0
      %1167 = vmatpush.msra.mxu0 0.0
      %1168 = vmatpush.msra.mxu0 0.0
      %1169 = vmatpush.msra.mxu0 0.0
      %1170 = vmatpush.msra.mxu0 %v1150
      %1171 = vmatpush.msra.mxu0 %v1148
      %1172 = vmatmul.f32.gmra.mxu0 %v1154
      %v1173 = vpop.f32.mrf.mxu0
      %v1174 = vadd.f32 0.0, %v1173
      %1175 = vdwg.mxu0
      %s1176 = scalar_lea.vmem %s3, 384
      %v1177 = vld [vmem:[%s1176] sm:$0xff]
      %v1178 = vld [vmem:[%s1176 + $0x8] sm:$0xff]
      %v1179 = vld [vmem:[%s1176 + $0x10] sm:$0xff]
      %v1180 = vld [vmem:[%s1176 + $0x18] sm:$0xff]
      %v1181 = vld [vmem:[%s1176 + $0x20] sm:$0xff]
      %v1182 = vld [vmem:[%s1176 + $0x28] sm:$0xff]
      %v1183 = vld [vmem:[%s1176 + $0x30] sm:$0xff]
      %v1184 = vld [vmem:[%s1176 + $0x38] sm:$0xff]
      %v1185 = vld [vmem:[%s1176 + $0x40] sm:$0xff]
      %v1186 = vld [vmem:[%s1176 + $0x48] sm:$0xff]
      %v1187 = vld [vmem:[%s1176 + $0x50] sm:$0xff]
      %v1188 = vld [vmem:[%s1176 + $0x58] sm:$0xff]
      %v1189 = vld [vmem:[%s1176 + $0x60] sm:$0xff]
      %v1190 = vld [vmem:[%s1176 + $0x68] sm:$0xff]
      %v1191 = vld [vmem:[%s1176 + $0x70] sm:$0xff]
      %v1192 = vld [vmem:[%s1176 + $0x78] sm:$0xff]
      %v1194 = vsel %vm718, %v1174, 0
      %1196 = vmatpush.msra.mxu0 0.0
      %1197 = vmatpush.msra.mxu0 0.0
      %1198 = vmatpush.msra.mxu0 0.0
      %1199 = vmatpush.msra.mxu0 0.0
      %1200 = vmatpush.msra.mxu0 0.0
      %1201 = vmatpush.msra.mxu0 0.0
      %1202 = vmatpush.msra.mxu0 0.0
      %1203 = vmatpush.msra.mxu0 0.0
      %1204 = vmatpush.msra.mxu0 %v1191
      %1205 = vmatpush.msra.mxu0 %v1189
      %1206 = vmatpush.msra.mxu0 %v1187
      %1207 = vmatpush.msra.mxu0 %v1185
      %1208 = vmatpush.msra.mxu0 %v1183
      %1209 = vmatpush.msra.mxu0 %v1181
      %1210 = vmatpush.msra.mxu0 %v1179
      %1211 = vmatpush.msra.mxu0 %v1177
      %1212 = vmatmul.f32.gmra.mxu0 %v1194
      %v1213 = vpop.f32.mrf.mxu0
      %v1214 = vadd.f32 0.0, %v1213
      %1215 = vdwg.mxu0
      %1216 = vmatpush.msra.mxu0 0.0
      %1217 = vmatpush.msra.mxu0 0.0
      %1218 = vmatpush.msra.mxu0 0.0
      %1219 = vmatpush.msra.mxu0 0.0
      %1220 = vmatpush.msra.mxu0 0.0
      %1221 = vmatpush.msra.mxu0 0.0
      %1222 = vmatpush.msra.mxu0 0.0
      %1223 = vmatpush.msra.mxu0 0.0
      %1224 = vmatpush.msra.mxu0 %v1192
      %1225 = vmatpush.msra.mxu0 %v1190
      %1226 = vmatpush.msra.mxu0 %v1188
      %1227 = vmatpush.msra.mxu0 %v1186
      %1228 = vmatpush.msra.mxu0 %v1184
      %1229 = vmatpush.msra.mxu0 %v1182
      %1230 = vmatpush.msra.mxu0 %v1180
      %1231 = vmatpush.msra.mxu0 %v1178
      %1232 = vmatmul.f32.gmra.mxu0 %v1194
      %v1233 = vpop.f32.mrf.mxu0
      %v1234 = vadd.f32 0.0, %v1233
      %1235 = vdwg.mxu0
      %v1236 = vadd.f32 %v1100, %v1214
      %v1237 = vadd.f32 %v1101, %v1234
      %v1238 = vperm.slane %v251, 3
      %v1239 = vperm.slane %v252, 3
      %v1240 = vadd.f32 %v1236, %v1238
      %v1241 = vadd.f32 %v1237, %v1239
      %v1242 = vadd.f32 %v249, %v1240
      %v1243 = vadd.f32 %v250, %v1241
      %v1244 = vadd.f32 %v1242, %v1243
      %1245 = vadd.xlane.f32.xlu0 %v1244
      %v1246 = vpop.xlane.xlu0 %1245
      %v1247 = vrcp.pop 256.0
      %v1248 = vmul.f32 256.0, %v1247
      %v1249 = vsub.f32 1.0, %v1248
      %v1250 = vmul.f32 %v1247, %v1249
      %v1251 = vadd.f32 %v1247, %v1250
      %vm1252 = vweird.f32 %v1247
      %v1253 = vsel %vm1252, %v1247, %v1251
      %v1254 = vmul.f32 %v1246, %v1253
      %v1255 = vsub.f32 %v1242, %v1254
      %v1256 = vsub.f32 %v1243, %v1254
      %v1257 = vmul.f32 %v1255, %v1255
      %v1258 = vmul.f32 %v1256, %v1256
      %v1259 = vadd.f32 %v1257, %v1258
      %1260 = vadd.xlane.f32.xlu0 %v1259
      %v1261 = vpop.xlane.xlu0 %1260
      %v1262 = vmul.f32 %v1261, %v1253
      %v1263 = vadd.f32 %v1262, 1e-05
      %v1264 = vrsqrt.pop %v1263
      %v1265 = vmul.f32 %v1264, %v1263
      %v1266 = vmul.f32 %v1265, %v1264
      %v1267 = vmul.f32 0.5, %v1266
      %v1268 = vsub.f32 1.5, %v1267
      %v1269 = vmul.f32 %v1264, %v1268
      %vm1270 = vweird.f32 %v1263
      %vm1271 = vweird.f32 %v1264
      %vm1272 = vmor %vm1270, %vm1271
      %v1273 = vsel %vm1272, %v1264, %v1269
      %v1274 = vmul.f32 %v1255, %v1273
      %v1275 = vmul.f32 %v1256, %v1273
      %v1276 = vperm.slane %v251, 4
      %v1277 = vperm.slane %v252, 4
      %v1278 = vmul.f32 %v1274, %v1276
      %v1279 = vmul.f32 %v1275, %v1277
      %v1280 = vperm.slane %v251, 5
      %v1281 = vperm.slane %v252, 5
      %v1282 = vadd.f32 %v1278, %v1280
      %v1283 = vadd.f32 %v1279, %v1281
      %1284 = vst [vmem:[%s244] sm:$0xff] %v1282
      %1285 = vst [vmem:[%s244 + $0x8] sm:$0xff] %v1283
      %p1286 = scmp.lt.s32.totalorder %s16, 1
      %s1287 = scalar_select %p1286, %s16, 1
      %s1288 = smul.addr %s1287, 2
      %s1289 = smul.addr %s1288, 8
      %s1290 = scalar_lea.vmem %s5, %s1289
      // Predicated region
      $region41: #{audio_video_inter.1} parent=39 // pred_check
        %p1291 = pneg %p149
      $region42: #{audio_video_inter.1} parent=39 // pred_check_branch
        %1293 = sbr.rel (%p1291) target = $region44
      $region43: #{audio_video_inter.1} parent=39 // pred_region
        _
      $region44: #{audio_video_inter.1} parent=39 // pred_fallthru
        _
    $region40: #{audio_video_inter.1} parent=5 // pred_fallthru
      _
    %p1294 = scmp.le.s32.totalorder 2, %s11
    // Predicated region
    $region45: #{audio_video_inter.1} parent=5 // pred_check
      %p1295 = pneg %p1294
    $region46: #{audio_video_inter.1} parent=5 // pred_check_branch
      %1297 = sbr.rel (%p1295) target = $region48
    $region47: #{audio_video_inter.1} parent=5 // pred_region
      %s1298 = ssub.s32 %s11, 2
      // Predicated region
      $region49: #{audio_video_inter.1} parent=47 // pred_check
        %p1299 = pneg %p155
      $region50: #{audio_video_inter.1} parent=47 // pred_check_branch
        %1301 = sbr.rel (%p1299) target = $region52
      $region51: #{audio_video_inter.1} parent=47 // pred_region
        %p1302 = scmp.lt.s32.totalorder %s17, 1
        %s1303 = scalar_select %p1302, %s17, 1
        %s1304 = smul.addr %s1303, 2
        %s1305 = smul.addr %s1304, 8
        %s1306 = scalar_lea.vmem %s5, %s1305
      $region52: #{audio_video_inter.1} parent=47 // pred_fallthru
        _
    $region48: #{audio_video_inter.1} parent=5 // pred_fallthru
      _
  $region6: #{audio_video_inter.1} parent=0 // loop_footer
    %s15 = sadd.s32 1, %s11
  $region7: #{audio_video_inter.1} parent=0 // loop_footer_branch
    %10 = sbr.rel target = $region3
  $region8: #{audio_video_inter.1} parent=0 // loop_exit
    _

</llo_original>
